<compile_context>
chip_gen: v7x
topology: tpu7x:2x2x1
jax: 0.10.0
libtpu: 0.0.40
codegen_flags: <defaults>
</compile_context>

<pallas_src>
import functools
import math

import jax
import jax.numpy as jnp
from jax.experimental import pallas as pl
from jax.experimental.pallas import tpu as pltpu


def _round_up(x, m):
    return (x + m - 1) // m * m


# ------------------------------------------------------------------ kernel ---
def _bilstm_decoder_kernel(
    x_ref,     # (1, T*Bt, 2*Dp)  bf16   rows = time-major, [x_t | x_{T-1-t}]
    w_in_ref,  # (2*Dp, 8*Hp)     bf16   fused/interleaved input projection
    b_ref,     # (1, 8*Hp)        f32    fused/interleaved LSTM bias
    whh_ref,   # (2*Hp, 8*Hp)     bf16   block-diagonal recurrent weights
    w1_ref,    # (2*Hp, 128)      f32    decoder Linear(2H, 8), lane-padded
    b1_ref,    # (1, 128)         f32
    w2_ref,    # (128, 128)       f32    decoder Linear(8, ncls), lane-padded
    b2_ref,    # (1, 128)         f32
    out_ref,   # (Bt, 128)        f32    lane-dense output
    gx_ref,    # (T*Bt, 8*Hp)     f32    VMEM scratch: precomputed x-gates
    *,
    seq_len,
    batch_tile,
):
    T, Bt = seq_len, batch_tile
    H2 = whh_ref.shape[0]  # 2*Hp = padded [h_fwd | h_bwd] width (== 128 lanes)

    # ---- hoisted input projection: one big matmul, off the recurrent path ----
    x_flat = x_ref[0]  # (T*Bt, 2*Dp) bf16
    gx_ref[...] = (
        jnp.dot(x_flat, w_in_ref[...], preferred_element_type=jnp.float32)
        + b_ref[...]  # bias added once here, not per step
    )

    whh = whh_ref[...]  # hoisted loop-invariant load (bf16)

    h = jnp.zeros((Bt, H2), jnp.float32)  # [h_fwd | h_bwd]
    c = jnp.zeros((Bt, H2), jnp.float32)  # [c_fwd | c_bwd]

    # ---- fully-unrolled bidirectional recurrence: one fused MXU op / step ----
    for t in range(T):
        gates = gx_ref[t * Bt:(t + 1) * Bt, :] + jnp.dot(
            h.astype(jnp.bfloat16), whh, preferred_element_type=jnp.float32
        )  # (Bt, 8*Hp), gate blocks are exact 128-lane slices
        i = jax.nn.sigmoid(gates[:, 0 * H2:1 * H2])
        f = jax.nn.sigmoid(gates[:, 1 * H2:2 * H2])
        g = jnp.tanh(gates[:, 2 * H2:3 * H2])
        o = jax.nn.sigmoid(gates[:, 3 * H2:4 * H2])
        c = f * c + i * g
        h = o * jnp.tanh(c)

    # h == concat([h_fwd_final, h_bwd_final])  (== PyTorch h_n reshaped (B, 2H))
    # ---- decoder: Linear -> Tanh -> Linear -> Tanh (lane-padded) ----
    z1 = jnp.tanh(
        jnp.dot(h, w1_ref[...], preferred_element_type=jnp.float32) + b1_ref[...]
    )
    out_ref[...] = jnp.tanh(
        jnp.dot(z1, w2_ref[...], preferred_element_type=jnp.float32) + b2_ref[...]
    )


def _run_kernel(x_tiles, kp, *, seq_len, b_tile):
    n_bt, rows, dp2 = x_tiles.shape
    gate_w = kp["w_in"].shape[1]
    ncls_pad = kp["w2"].shape[1]
    kernel = functools.partial(
        _bilstm_decoder_kernel, seq_len=seq_len, batch_tile=b_tile
    )
    full2 = lambda b: (0, 0)
    return pl.pallas_call(
        kernel,
        out_shape=jax.ShapeDtypeStruct((n_bt * b_tile, ncls_pad), jnp.float32),
        grid_spec=pltpu.PrefetchScalarGridSpec(
            num_scalar_prefetch=0,
            grid=(n_bt,),
            in_specs=[
                pl.BlockSpec((1, rows, dp2), lambda b: (b, 0, 0)),
                pl.BlockSpec(kp["w_in"].shape, full2),
                pl.BlockSpec(kp["b"].shape, full2),
                pl.BlockSpec(kp["whh"].shape, full2),
                pl.BlockSpec(kp["w1"].shape, full2),
                pl.BlockSpec(kp["b1"].shape, full2),
                pl.BlockSpec(kp["w2"].shape, full2),
                pl.BlockSpec(kp["b2"].shape, full2),
            ],
            out_specs=pl.BlockSpec((b_tile, ncls_pad), lambda b: (b, 0)),
            scratch_shapes=[pltpu.VMEM((rows, gate_w), jnp.float32)],
        ),
        compiler_params=pltpu.CompilerParams(
            dimension_semantics=("parallel",)  # batch tiles -> v7x megacore
        ),
    )(
        x_tiles,
        kp["w_in"], kp["b"], kp["whh"],
        kp["w1"], kp["b1"], kp["w2"], kp["b2"],
    )


# ------------------------------------------------------------ model wrapper ---
def rnn_model_forward(params, kparams, tokens, input_pos, char_lens,
                      input_lengths, *, nhid, ncls, b_tile=8):
    """Mirrors RNNModel.forward (eval mode, LSTM, bidirectional)."""
    B, T = tokens.shape
    emb = params["emb_matrix"][tokens]            # (B, T, ninp)
    pos_emb = params["pos_emb"][input_pos]        # (B, T, 50)
    cl = char_lens[..., None].astype(jnp.float32)
    x = jnp.concatenate([emb, pos_emb, cl], axis=-1)   # (B, T, d_in)
    d_in = x.shape[-1]
    d_pad = _round_up(d_in, 128)

    # sort_by_lens: descending by input_lengths (reference does not pack, so
    # the LSTM still sees the full T steps; only the row order changes)
    sort_order = jnp.argsort(-input_lengths)
    x_sorted = x[sort_order]

    # time-major + batch/lane padding
    b_pad = _round_up(max(B, b_tile), b_tile)
    x_tm = jnp.transpose(x_sorted, (1, 0, 2))                 # (T, B, d_in)
    x_tm = jnp.pad(x_tm, ((0, 0), (0, b_pad - B), (0, d_pad - d_in)))
    # pair each step with its time-reversed partner so the fused kernel can
    # precompute forward+backward input gates in one matmul
    x_pair = jnp.concatenate([x_tm, x_tm[::-1]], axis=-1)     # (T, b_pad, 2*d_pad)

    # regroup into batch tiles, time-major rows contiguous inside each tile
    n_bt = b_pad // b_tile
    x_tiles = (
        x_pair.reshape(T, n_bt, b_tile, 2 * d_pad)
        .transpose(1, 0, 2, 3)
        .reshape(n_bt, T * b_tile, 2 * d_pad)
        .astype(jnp.bfloat16)
    )

    decoded_pad = _run_kernel(x_tiles, kparams, seq_len=T, b_tile=b_tile)
    decoded_sorted = decoded_pad[:B, :ncls]

    # unsort (scatter rows back to original positions)
    decoded = jnp.zeros_like(decoded_sorted).at[sort_order].set(decoded_sorted)
    return decoded


# ------------------------------------------------------------- param setup ---
def xavier_uniform(key, shape):
    fan_out, fan_in = shape
    a = math.sqrt(6.0 / (fan_in + fan_out))
    return jax.random.uniform(key, shape, jnp.float32, -a, a)


def make_params(key, vocab, ninp, npos, nhid, ncls):
    """Parameters in PyTorch layout (gate order i, f, g, o)."""
    d_in = ninp + 50 + 1
    ks = jax.random.split(key, 10)
    return dict(
        emb_matrix=jax.random.normal(ks[0], (vocab, ninp), jnp.float32),
        pos_emb=jax.random.normal(ks[1], (npos, 50), jnp.float32),
        # LSTM: weights xavier, biases 0 (per RNNModel.init_weights); b = b_ih+b_hh
        w_ih_f=xavier_uniform(ks[2], (4 * nhid, d_in)),
        w_hh_f=xavier_uniform(ks[3], (4 * nhid, nhid)),
        b_f=jnp.zeros((4 * nhid,), jnp.float32),
        w_ih_b=xavier_uniform(ks[4], (4 * nhid, d_in)),
        w_hh_b=xavier_uniform(ks[5], (4 * nhid, nhid)),
        b_b=jnp.zeros((4 * nhid,), jnp.float32),
        # decoder: Linear(2H,8) -> Tanh -> Linear(8,ncls) -> Tanh
        # (weights xavier; biases keep PyTorch Linear default U(-1/sqrt(fan_in),..))
        dec_w1=xavier_uniform(ks[6], (8, 2 * nhid)),
        dec_b1=jax.random.uniform(ks[7], (8,), jnp.float32,
                                  -1.0 / math.sqrt(2 * nhid),
                                  1.0 / math.sqrt(2 * nhid)),
        dec_w2=xavier_uniform(ks[8], (ncls, 8)),
        dec_b2=jax.random.uniform(ks[9], (ncls,), jnp.float32,
                                  -1.0 / math.sqrt(8), 1.0 / math.sqrt(8)),
    )


def pack_kernel_params(p, *, nhid, ninp, ncls):
    """Repack PyTorch-layout params into the fused / lane-aligned kernel layout."""
    H = nhid
    Hp = _round_up(H, 64)          # per-direction pad so 2*Hp is a 128-lane multiple
    d_in = ninp + 50 + 1
    d_pad = _round_up(d_in, 128)
    dh_pad = 128                   # decoder hidden (8) padded to one lane width
    ncls_pad = 128                 # lane-dense output

    def fwd_cols(k):  # real forward columns of gate k in the interleaved layout
        return slice(2 * k * Hp, 2 * k * Hp + H)

    def bwd_cols(k):  # real backward columns of gate k
        return slice(2 * k * Hp + Hp, 2 * k * Hp + Hp + H)

    wif_T = p["w_ih_f"].T   # (d_in, 4H)
    wib_T = p["w_ih_b"].T
    whf_T = p["w_hh_f"].T   # (H, 4H)
    whb_T = p["w_hh_b"].T

    w_in = jnp.zeros((2 * d_pad, 8 * Hp), jnp.float32)
    whh = jnp.zeros((2 * Hp, 8 * Hp), jnp.float32)   # block-diag over directions
    b = jnp.zeros((1, 8 * Hp), jnp.float32)
    for k in range(4):
        w_in = w_in.at[:d_in, fwd_cols(k)].set(wif_T[:, k * H:(k + 1) * H])
        w_in = w_in.at[d_pad:d_pad + d_in, bwd_cols(k)].set(
            wib_T[:, k * H:(k + 1) * H])
        whh = whh.at[:H, fwd_cols(k)].set(whf_T[:, k * H:(k + 1) * H])
        whh = whh.at[Hp:Hp + H, bwd_cols(k)].set(whb_T[:, k * H:(k + 1) * H])
        b = b.at[0, fwd_cols(k)].set(p["b_f"][k * H:(k + 1) * H])
        b = b.at[0, bwd_cols(k)].set(p["b_b"][k * H:(k + 1) * H])

    w1T = p["dec_w1"].T     # (2H, 8)
    w1 = jnp.zeros((2 * Hp, dh_pad), jnp.float32)
    w1 = w1.at[:H, :8].set(w1T[:H])          # forward-hidden rows
    w1 = w1.at[Hp:Hp + H, :8].set(w1T[H:])   # backward-hidden rows
    b1 = jnp.zeros((1, dh_pad), jnp.float32).at[0, :8].set(p["dec_b1"])
    w2 = jnp.zeros((dh_pad, ncls_pad), jnp.float32).at[:8, :ncls].set(p["dec_w2"].T)
    b2 = jnp.zeros((1, ncls_pad), jnp.float32).at[0, :ncls].set(p["dec_b2"])

    return dict(
        w_in=w_in.astype(jnp.bfloat16),
        b=b,
        whh=whh.astype(jnp.bfloat16),
        w1=w1, b1=b1, w2=w2, b2=b2,
    )


# -------------------------------------------------------------------- main ---
if __name__ == "__main__":
    B, T = 2, 8
    vocab, ninp, npos, nhid, ncls = 20, 16, 10, 32, 3

    key = jax.random.PRNGKey(0)
    k_par, k_tok, k_pos, k_cl, k_len = jax.random.split(key, 5)

    params = make_params(k_par, vocab, ninp, npos, nhid, ncls)
    kparams = pack_kernel_params(params, nhid=nhid, ninp=ninp, ncls=ncls)

    tokens = jax.random.randint(k_tok, (B, T), 0, vocab, jnp.int32)
    input_pos = jax.random.randint(k_pos, (B, T), 0, npos, jnp.int32)
    char_lens = jax.random.uniform(k_cl, (B, T), jnp.float32, 1.0, 5.0)
    input_lengths = jax.random.randint(k_len, (B,), 1, T + 1, jnp.int32)

    fwd = jax.jit(functools.partial(rnn_model_forward, nhid=nhid, ncls=ncls))
    out = fwd(params, kparams, tokens, input_pos, char_lens, input_lengths)
    jax.block_until_ready(out)
    assert out.shape == (B, ncls)
    print("KERNEL_OK")
</pallas_src>

<mosaic_0001>
module attributes {stable_mosaic.version = 11 : i64} {
  func.func @_bilstm_decoder_kernel(%arg0: i32, %arg1: memref<1x64x256xbf16, #tpu.memory_space<vmem>>, %arg2: memref<256x512xbf16, #tpu.memory_space<vmem>>, %arg3: memref<1x512xf32, #tpu.memory_space<vmem>>, %arg4: memref<128x512xbf16, #tpu.memory_space<vmem>>, %arg5: memref<128x128xf32, #tpu.memory_space<vmem>>, %arg6: memref<1x128xf32, #tpu.memory_space<vmem>>, %arg7: memref<128x128xf32, #tpu.memory_space<vmem>>, %arg8: memref<1x128xf32, #tpu.memory_space<vmem>>, %arg9: memref<8x128xf32, #tpu.memory_space<vmem>>, %arg10: memref<64x512xf32, #tpu.memory_space<vmem>>) attributes {dimension_semantics = [#tpu.dimension_semantics<parallel>], iteration_bounds = array<i64: 1>, scalar_prefetch = 0 : i64, scratch_operands = 1 : i64, tpu.core_type = #tpu.core_type<tc>, window_params = [{transform_indices = @transform_0, window_bounds = array<i64: 1, 64, 256>}, {pipeline_mode = #tpu.pipeline_mode<synchronous>, transform_indices = @transform_1, window_bounds = array<i64: 256, 512>}, {pipeline_mode = #tpu.pipeline_mode<synchronous>, transform_indices = @transform_2, window_bounds = array<i64: 1, 512>}, {pipeline_mode = #tpu.pipeline_mode<synchronous>, transform_indices = @transform_3, window_bounds = array<i64: 128, 512>}, {pipeline_mode = #tpu.pipeline_mode<synchronous>, transform_indices = @transform_4, window_bounds = array<i64: 128, 128>}, {pipeline_mode = #tpu.pipeline_mode<synchronous>, transform_indices = @transform_5, window_bounds = array<i64: 1, 128>}, {pipeline_mode = #tpu.pipeline_mode<synchronous>, transform_indices = @transform_6, window_bounds = array<i64: 128, 128>}, {pipeline_mode = #tpu.pipeline_mode<synchronous>, transform_indices = @transform_7, window_bounds = array<i64: 1, 128>}, {transform_indices = @transform_8, window_bounds = array<i64: 8, 128>}]} {
    %c0 = arith.constant 0 : index
    %c0_0 = arith.constant 0 : index
    %c0_1 = arith.constant 0 : index
    %0 = vector.load %arg1[%c0, %c0_0, %c0_1] : memref<1x64x256xbf16, #tpu.memory_space<vmem>>, vector<1x64x256xbf16>
    %1 = vector.shape_cast %0 : vector<1x64x256xbf16> to vector<64x256xbf16>
    %c0_2 = arith.constant 0 : index
    %c0_3 = arith.constant 0 : index
    %2 = vector.load %arg2[%c0_2, %c0_3] : memref<256x512xbf16, #tpu.memory_space<vmem>>, vector<256x512xbf16>
    %cst = arith.constant dense<0.000000e+00> : vector<64x512xf32>
    %3 = tpu.matmul %1, %2, %cst {dimension_numbers = #tpu.dot_dimension_numbers<[1], [0], [0], [1], [0, 0, 1, 1], [], []>} : vector<64x256xbf16>, vector<256x512xbf16>, vector<64x512xf32> -> vector<64x512xf32>
    %c0_4 = arith.constant 0 : index
    %c0_5 = arith.constant 0 : index
    %4 = vector.load %arg3[%c0_4, %c0_5] : memref<1x512xf32, #tpu.memory_space<vmem>>, vector<1x512xf32>
    %5 = vector.broadcast %4 : vector<1x512xf32> to vector<64x512xf32>
    %6 = arith.addf %3, %5 : vector<64x512xf32>
    %c0_6 = arith.constant 0 : index
    %c0_7 = arith.constant 0 : index
    %7 = vector.load %arg10[%c0_6, %c0_7] : memref<64x512xf32, #tpu.memory_space<vmem>>, vector<64x512xf32>
    tpu.vector_store %arg10[%c0_6, %c0_7], %6 {strides = array<i32>} : memref<64x512xf32, #tpu.memory_space<vmem>>, vector<64x512xf32>,
    %c0_8 = arith.constant 0 : index
    %c0_9 = arith.constant 0 : index
    %8 = vector.load %arg4[%c0_8, %c0_9] : memref<128x512xbf16, #tpu.memory_space<vmem>>, vector<128x512xbf16>
    %cst_10 = arith.constant 0.000000e+00 : f32
    %9 = vector.broadcast %cst_10 : f32 to vector<8x128xf32>
    %cst_11 = arith.constant 0.000000e+00 : f32
    %10 = vector.broadcast %cst_11 : f32 to vector<8x128xf32>
    %c0_12 = arith.constant 0 : index
    %c0_13 = arith.constant 0 : index
    %11 = vector.load %arg10[%c0_12, %c0_13] : memref<64x512xf32, #tpu.memory_space<vmem>>, vector<8x512xf32>
    %12 = arith.truncf %9 : vector<8x128xf32> to vector<8x128xbf16>
    %cst_14 = arith.constant dense<0.000000e+00> : vector<8x512xf32>
    %13 = tpu.matmul %12, %8, %cst_14 {dimension_numbers = #tpu.dot_dimension_numbers<[1], [0], [0], [1], [0, 0, 1, 1], [], []>} : vector<8x128xbf16>, vector<128x512xbf16>, vector<8x512xf32> -> vector<8x512xf32>
    %14 = arith.addf %11, %13 : vector<8x512xf32>
    %15 = vector.extract_strided_slice %14 {offsets = [0, 0], sizes = [8, 128], strides = [1, 1]} : vector<8x512xf32> to vector<8x128xf32>
    %16 = arith.negf %15 : vector<8x128xf32>
    %17 = math.exp %16 : vector<8x128xf32>
    %cst_15 = arith.constant 1.000000e+00 : f32
    %18 = vector.broadcast %cst_15 : f32 to vector<8x128xf32>
    %19 = arith.addf %18, %17 : vector<8x128xf32>
    %20 = arith.divf %18, %19 : vector<8x128xf32>
    %21 = vector.extract_strided_slice %14 {offsets = [0, 128], sizes = [8, 128], strides = [1, 1]} : vector<8x512xf32> to vector<8x128xf32>
    %22 = arith.negf %21 : vector<8x128xf32>
    %23 = math.exp %22 : vector<8x128xf32>
    %cst_16 = arith.constant 1.000000e+00 : f32
    %24 = vector.broadcast %cst_16 : f32 to vector<8x128xf32>
    %25 = arith.addf %24, %23 : vector<8x128xf32>
    %26 = arith.divf %24, %25 : vector<8x128xf32>
    %27 = vector.extract_strided_slice %14 {offsets = [0, 256], sizes = [8, 128], strides = [1, 1]} : vector<8x512xf32> to vector<8x128xf32>
    %28 = math.tanh %27 : vector<8x128xf32>
    %29 = vector.extract_strided_slice %14 {offsets = [0, 384], sizes = [8, 128], strides = [1, 1]} : vector<8x512xf32> to vector<8x128xf32>
    %30 = arith.negf %29 : vector<8x128xf32>
    %31 = math.exp %30 : vector<8x128xf32>
    %cst_17 = arith.constant 1.000000e+00 : f32
    %32 = vector.broadcast %cst_17 : f32 to vector<8x128xf32>
    %33 = arith.addf %32, %31 : vector<8x128xf32>
    %34 = arith.divf %32, %33 : vector<8x128xf32>
    %35 = arith.mulf %26, %10 : vector<8x128xf32>
    %36 = arith.mulf %20, %28 : vector<8x128xf32>
    %37 = arith.addf %35, %36 : vector<8x128xf32>
    %38 = math.tanh %37 : vector<8x128xf32>
    %39 = arith.mulf %34, %38 : vector<8x128xf32>
    %c8 = arith.constant 8 : index
    %c0_18 = arith.constant 0 : index
    %40 = vector.load %arg10[%c8, %c0_18] : memref<64x512xf32, #tpu.memory_space<vmem>>, vector<8x512xf32>
    %41 = arith.truncf %39 : vector<8x128xf32> to vector<8x128xbf16>
    %cst_19 = arith.constant dense<0.000000e+00> : vector<8x512xf32>
    %42 = tpu.matmul %41, %8, %cst_19 {dimension_numbers = #tpu.dot_dimension_numbers<[1], [0], [0], [1], [0, 0, 1, 1], [], []>} : vector<8x128xbf16>, vector<128x512xbf16>, vector<8x512xf32> -> vector<8x512xf32>
    %43 = arith.addf %40, %42 : vector<8x512xf32>
    %44 = vector.extract_strided_slice %43 {offsets = [0, 0], sizes = [8, 128], strides = [1, 1]} : vector<8x512xf32> to vector<8x128xf32>
    %45 = arith.negf %44 : vector<8x128xf32>
    %46 = math.exp %45 : vector<8x128xf32>
    %cst_20 = arith.constant 1.000000e+00 : f32
    %47 = vector.broadcast %cst_20 : f32 to vector<8x128xf32>
    %48 = arith.addf %47, %46 : vector<8x128xf32>
    %49 = arith.divf %47, %48 : vector<8x128xf32>
    %50 = vector.extract_strided_slice %43 {offsets = [0, 128], sizes = [8, 128], strides = [1, 1]} : vector<8x512xf32> to vector<8x128xf32>
    %51 = arith.negf %50 : vector<8x128xf32>
    %52 = math.exp %51 : vector<8x128xf32>
    %cst_21 = arith.constant 1.000000e+00 : f32
    %53 = vector.broadcast %cst_21 : f32 to vector<8x128xf32>
    %54 = arith.addf %53, %52 : vector<8x128xf32>
    %55 = arith.divf %53, %54 : vector<8x128xf32>
    %56 = vector.extract_strided_slice %43 {offsets = [0, 256], sizes = [8, 128], strides = [1, 1]} : vector<8x512xf32> to vector<8x128xf32>
    %57 = math.tanh %56 : vector<8x128xf32>
    %58 = vector.extract_strided_slice %43 {offsets = [0, 384], sizes = [8, 128], strides = [1, 1]} : vector<8x512xf32> to vector<8x128xf32>
    %59 = arith.negf %58 : vector<8x128xf32>
    %60 = math.exp %59 : vector<8x128xf32>
    %cst_22 = arith.constant 1.000000e+00 : f32
    %61 = vector.broadcast %cst_22 : f32 to vector<8x128xf32>
    %62 = arith.addf %61, %60 : vector<8x128xf32>
    %63 = arith.divf %61, %62 : vector<8x128xf32>
    %64 = arith.mulf %55, %37 : vector<8x128xf32>
    %65 = arith.mulf %49, %57 : vector<8x128xf32>
    %66 = arith.addf %64, %65 : vector<8x128xf32>
    %67 = math.tanh %66 : vector<8x128xf32>
    %68 = arith.mulf %63, %67 : vector<8x128xf32>
    %c16 = arith.constant 16 : index
    %c0_23 = arith.constant 0 : index
    %69 = vector.load %arg10[%c16, %c0_23] : memref<64x512xf32, #tpu.memory_space<vmem>>, vector<8x512xf32>
    %70 = arith.truncf %68 : vector<8x128xf32> to vector<8x128xbf16>
    %cst_24 = arith.constant dense<0.000000e+00> : vector<8x512xf32>
    %71 = tpu.matmul %70, %8, %cst_24 {dimension_numbers = #tpu.dot_dimension_numbers<[1], [0], [0], [1], [0, 0, 1, 1], [], []>} : vector<8x128xbf16>, vector<128x512xbf16>, vector<8x512xf32> -> vector<8x512xf32>
    %72 = arith.addf %69, %71 : vector<8x512xf32>
    %73 = vector.extract_strided_slice %72 {offsets = [0, 0], sizes = [8, 128], strides = [1, 1]} : vector<8x512xf32> to vector<8x128xf32>
    %74 = arith.negf %73 : vector<8x128xf32>
    %75 = math.exp %74 : vector<8x128xf32>
    %cst_25 = arith.constant 1.000000e+00 : f32
    %76 = vector.broadcast %cst_25 : f32 to vector<8x128xf32>
    %77 = arith.addf %76, %75 : vector<8x128xf32>
    %78 = arith.divf %76, %77 : vector<8x128xf32>
    %79 = vector.extract_strided_slice %72 {offsets = [0, 128], sizes = [8, 128], strides = [1, 1]} : vector<8x512xf32> to vector<8x128xf32>
    %80 = arith.negf %79 : vector<8x128xf32>
    %81 = math.exp %80 : vector<8x128xf32>
    %cst_26 = arith.constant 1.000000e+00 : f32
    %82 = vector.broadcast %cst_26 : f32 to vector<8x128xf32>
    %83 = arith.addf %82, %81 : vector<8x128xf32>
    %84 = arith.divf %82, %83 : vector<8x128xf32>
    %85 = vector.extract_strided_slice %72 {offsets = [0, 256], sizes = [8, 128], strides = [1, 1]} : vector<8x512xf32> to vector<8x128xf32>
    %86 = math.tanh %85 : vector<8x128xf32>
    %87 = vector.extract_strided_slice %72 {offsets = [0, 384], sizes = [8, 128], strides = [1, 1]} : vector<8x512xf32> to vector<8x128xf32>
    %88 = arith.negf %87 : vector<8x128xf32>
    %89 = math.exp %88 : vector<8x128xf32>
    %cst_27 = arith.constant 1.000000e+00 : f32
    %90 = vector.broadcast %cst_27 : f32 to vector<8x128xf32>
    %91 = arith.addf %90, %89 : vector<8x128xf32>
    %92 = arith.divf %90, %91 : vector<8x128xf32>
    %93 = arith.mulf %84, %66 : vector<8x128xf32>
    %94 = arith.mulf %78, %86 : vector<8x128xf32>
    %95 = arith.addf %93, %94 : vector<8x128xf32>
    %96 = math.tanh %95 : vector<8x128xf32>
    %97 = arith.mulf %92, %96 : vector<8x128xf32>
    %c24 = arith.constant 24 : index
    %c0_28 = arith.constant 0 : index
    %98 = vector.load %arg10[%c24, %c0_28] : memref<64x512xf32, #tpu.memory_space<vmem>>, vector<8x512xf32>
    %99 = arith.truncf %97 : vector<8x128xf32> to vector<8x128xbf16>
    %cst_29 = arith.constant dense<0.000000e+00> : vector<8x512xf32>
    %100 = tpu.matmul %99, %8, %cst_29 {dimension_numbers = #tpu.dot_dimension_numbers<[1], [0], [0], [1], [0, 0, 1, 1], [], []>} : vector<8x128xbf16>, vector<128x512xbf16>, vector<8x512xf32> -> vector<8x512xf32>
    %101 = arith.addf %98, %100 : vector<8x512xf32>
    %102 = vector.extract_strided_slice %101 {offsets = [0, 0], sizes = [8, 128], strides = [1, 1]} : vector<8x512xf32> to vector<8x128xf32>
    %103 = arith.negf %102 : vector<8x128xf32>
    %104 = math.exp %103 : vector<8x128xf32>
    %cst_30 = arith.constant 1.000000e+00 : f32
    %105 = vector.broadcast %cst_30 : f32 to vector<8x128xf32>
    %106 = arith.addf %105, %104 : vector<8x128xf32>
    %107 = arith.divf %105, %106 : vector<8x128xf32>
    %108 = vector.extract_strided_slice %101 {offsets = [0, 128], sizes = [8, 128], strides = [1, 1]} : vector<8x512xf32> to vector<8x128xf32>
    %109 = arith.negf %108 : vector<8x128xf32>
    %110 = math.exp %109 : vector<8x128xf32>
    %cst_31 = arith.constant 1.000000e+00 : f32
    %111 = vector.broadcast %cst_31 : f32 to vector<8x128xf32>
    %112 = arith.addf %111, %110 : vector<8x128xf32>
    %113 = arith.divf %111, %112 : vector<8x128xf32>
    %114 = vector.extract_strided_slice %101 {offsets = [0, 256], sizes = [8, 128], strides = [1, 1]} : vector<8x512xf32> to vector<8x128xf32>
    %115 = math.tanh %114 : vector<8x128xf32>
    %116 = vector.extract_strided_slice %101 {offsets = [0, 384], sizes = [8, 128], strides = [1, 1]} : vector<8x512xf32> to vector<8x128xf32>
    %117 = arith.negf %116 : vector<8x128xf32>
    %118 = math.exp %117 : vector<8x128xf32>
    %cst_32 = arith.constant 1.000000e+00 : f32
    %119 = vector.broadcast %cst_32 : f32 to vector<8x128xf32>
    %120 = arith.addf %119, %118 : vector<8x128xf32>
    %121 = arith.divf %119, %120 : vector<8x128xf32>
    %122 = arith.mulf %113, %95 : vector<8x128xf32>
    %123 = arith.mulf %107, %115 : vector<8x128xf32>
    %124 = arith.addf %122, %123 : vector<8x128xf32>
    %125 = math.tanh %124 : vector<8x128xf32>
    %126 = arith.mulf %121, %125 : vector<8x128xf32>
    %c32 = arith.constant 32 : index
    %c0_33 = arith.constant 0 : index
    %127 = vector.load %arg10[%c32, %c0_33] : memref<64x512xf32, #tpu.memory_space<vmem>>, vector<8x512xf32>
    %128 = arith.truncf %126 : vector<8x128xf32> to vector<8x128xbf16>
    %cst_34 = arith.constant dense<0.000000e+00> : vector<8x512xf32>
    %129 = tpu.matmul %128, %8, %cst_34 {dimension_numbers = #tpu.dot_dimension_numbers<[1], [0], [0], [1], [0, 0, 1, 1], [], []>} : vector<8x128xbf16>, vector<128x512xbf16>, vector<8x512xf32> -> vector<8x512xf32>
    %130 = arith.addf %127, %129 : vector<8x512xf32>
    %131 = vector.extract_strided_slice %130 {offsets = [0, 0], sizes = [8, 128], strides = [1, 1]} : vector<8x512xf32> to vector<8x128xf32>
    %132 = arith.negf %131 : vector<8x128xf32>
    %133 = math.exp %132 : vector<8x128xf32>
    %cst_35 = arith.constant 1.000000e+00 : f32
    %134 = vector.broadcast %cst_35 : f32 to vector<8x128xf32>
    %135 = arith.addf %134, %133 : vector<8x128xf32>
    %136 = arith.divf %134, %135 : vector<8x128xf32>
    %137 = vector.extract_strided_slice %130 {offsets = [0, 128], sizes = [8, 128], strides = [1, 1]} : vector<8x512xf32> to vector<8x128xf32>
    %138 = arith.negf %137 : vector<8x128xf32>
    %139 = math.exp %138 : vector<8x128xf32>
    %cst_36 = arith.constant 1.000000e+00 : f32
    %140 = vector.broadcast %cst_36 : f32 to vector<8x128xf32>
    %141 = arith.addf %140, %139 : vector<8x128xf32>
    %142 = arith.divf %140, %141 : vector<8x128xf32>
    %143 = vector.extract_strided_slice %130 {offsets = [0, 256], sizes = [8, 128], strides = [1, 1]} : vector<8x512xf32> to vector<8x128xf32>
    %144 = math.tanh %143 : vector<8x128xf32>
    %145 = vector.extract_strided_slice %130 {offsets = [0, 384], sizes = [8, 128], strides = [1, 1]} : vector<8x512xf32> to vector<8x128xf32>
    %146 = arith.negf %145 : vector<8x128xf32>
    %147 = math.exp %146 : vector<8x128xf32>
    %cst_37 = arith.constant 1.000000e+00 : f32
    %148 = vector.broadcast %cst_37 : f32 to vector<8x128xf32>
    %149 = arith.addf %148, %147 : vector<8x128xf32>
    %150 = arith.divf %148, %149 : vector<8x128xf32>
    %151 = arith.mulf %142, %124 : vector<8x128xf32>
    %152 = arith.mulf %136, %144 : vector<8x128xf32>
    %153 = arith.addf %151, %152 : vector<8x128xf32>
    %154 = math.tanh %153 : vector<8x128xf32>
    %155 = arith.mulf %150, %154 : vector<8x128xf32>
    %c40 = arith.constant 40 : index
    %c0_38 = arith.constant 0 : index
    %156 = vector.load %arg10[%c40, %c0_38] : memref<64x512xf32, #tpu.memory_space<vmem>>, vector<8x512xf32>
    %157 = arith.truncf %155 : vector<8x128xf32> to vector<8x128xbf16>
    %cst_39 = arith.constant dense<0.000000e+00> : vector<8x512xf32>
    %158 = tpu.matmul %157, %8, %cst_39 {dimension_numbers = #tpu.dot_dimension_numbers<[1], [0], [0], [1], [0, 0, 1, 1], [], []>} : vector<8x128xbf16>, vector<128x512xbf16>, vector<8x512xf32> -> vector<8x512xf32>
    %159 = arith.addf %156, %158 : vector<8x512xf32>
    %160 = vector.extract_strided_slice %159 {offsets = [0, 0], sizes = [8, 128], strides = [1, 1]} : vector<8x512xf32> to vector<8x128xf32>
    %161 = arith.negf %160 : vector<8x128xf32>
    %162 = math.exp %161 : vector<8x128xf32>
    %cst_40 = arith.constant 1.000000e+00 : f32
    %163 = vector.broadcast %cst_40 : f32 to vector<8x128xf32>
    %164 = arith.addf %163, %162 : vector<8x128xf32>
    %165 = arith.divf %163, %164 : vector<8x128xf32>
    %166 = vector.extract_strided_slice %159 {offsets = [0, 128], sizes = [8, 128], strides = [1, 1]} : vector<8x512xf32> to vector<8x128xf32>
    %167 = arith.negf %166 : vector<8x128xf32>
    %168 = math.exp %167 : vector<8x128xf32>
    %cst_41 = arith.constant 1.000000e+00 : f32
    %169 = vector.broadcast %cst_41 : f32 to vector<8x128xf32>
    %170 = arith.addf %169, %168 : vector<8x128xf32>
    %171 = arith.divf %169, %170 : vector<8x128xf32>
    %172 = vector.extract_strided_slice %159 {offsets = [0, 256], sizes = [8, 128], strides = [1, 1]} : vector<8x512xf32> to vector<8x128xf32>
    %173 = math.tanh %172 : vector<8x128xf32>
    %174 = vector.extract_strided_slice %159 {offsets = [0, 384], sizes = [8, 128], strides = [1, 1]} : vector<8x512xf32> to vector<8x128xf32>
    %175 = arith.negf %174 : vector<8x128xf32>
    %176 = math.exp %175 : vector<8x128xf32>
    %cst_42 = arith.constant 1.000000e+00 : f32
    %177 = vector.broadcast %cst_42 : f32 to vector<8x128xf32>
    %178 = arith.addf %177, %176 : vector<8x128xf32>
    %179 = arith.divf %177, %178 : vector<8x128xf32>
    %180 = arith.mulf %171, %153 : vector<8x128xf32>
    %181 = arith.mulf %165, %173 : vector<8x128xf32>
    %182 = arith.addf %180, %181 : vector<8x128xf32>
    %183 = math.tanh %182 : vector<8x128xf32>
    %184 = arith.mulf %179, %183 : vector<8x128xf32>
    %c48 = arith.constant 48 : index
    %c0_43 = arith.constant 0 : index
    %185 = vector.load %arg10[%c48, %c0_43] : memref<64x512xf32, #tpu.memory_space<vmem>>, vector<8x512xf32>
    %186 = arith.truncf %184 : vector<8x128xf32> to vector<8x128xbf16>
    %cst_44 = arith.constant dense<0.000000e+00> : vector<8x512xf32>
    %187 = tpu.matmul %186, %8, %cst_44 {dimension_numbers = #tpu.dot_dimension_numbers<[1], [0], [0], [1], [0, 0, 1, 1], [], []>} : vector<8x128xbf16>, vector<128x512xbf16>, vector<8x512xf32> -> vector<8x512xf32>
    %188 = arith.addf %185, %187 : vector<8x512xf32>
    %189 = vector.extract_strided_slice %188 {offsets = [0, 0], sizes = [8, 128], strides = [1, 1]} : vector<8x512xf32> to vector<8x128xf32>
    %190 = arith.negf %189 : vector<8x128xf32>
    %191 = math.exp %190 : vector<8x128xf32>
    %cst_45 = arith.constant 1.000000e+00 : f32
    %192 = vector.broadcast %cst_45 : f32 to vector<8x128xf32>
    %193 = arith.addf %192, %191 : vector<8x128xf32>
    %194 = arith.divf %192, %193 : vector<8x128xf32>
    %195 = vector.extract_strided_slice %188 {offsets = [0, 128], sizes = [8, 128], strides = [1, 1]} : vector<8x512xf32> to vector<8x128xf32>
    %196 = arith.negf %195 : vector<8x128xf32>
    %197 = math.exp %196 : vector<8x128xf32>
    %cst_46 = arith.constant 1.000000e+00 : f32
    %198 = vector.broadcast %cst_46 : f32 to vector<8x128xf32>
    %199 = arith.addf %198, %197 : vector<8x128xf32>
    %200 = arith.divf %198, %199 : vector<8x128xf32>
    %201 = vector.extract_strided_slice %188 {offsets = [0, 256], sizes = [8, 128], strides = [1, 1]} : vector<8x512xf32> to vector<8x128xf32>
    %202 = math.tanh %201 : vector<8x128xf32>
    %203 = vector.extract_strided_slice %188 {offsets = [0, 384], sizes = [8, 128], strides = [1, 1]} : vector<8x512xf32> to vector<8x128xf32>
    %204 = arith.negf %203 : vector<8x128xf32>
    %205 = math.exp %204 : vector<8x128xf32>
    %cst_47 = arith.constant 1.000000e+00 : f32
    %206 = vector.broadcast %cst_47 : f32 to vector<8x128xf32>
    %207 = arith.addf %206, %205 : vector<8x128xf32>
    %208 = arith.divf %206, %207 : vector<8x128xf32>
    %209 = arith.mulf %200, %182 : vector<8x128xf32>
    %210 = arith.mulf %194, %202 : vector<8x128xf32>
    %211 = arith.addf %209, %210 : vector<8x128xf32>
    %212 = math.tanh %211 : vector<8x128xf32>
    %213 = arith.mulf %208, %212 : vector<8x128xf32>
    %c56 = arith.constant 56 : index
    %c0_48 = arith.constant 0 : index
    %214 = vector.load %arg10[%c56, %c0_48] : memref<64x512xf32, #tpu.memory_space<vmem>>, vector<8x512xf32>
    %215 = arith.truncf %213 : vector<8x128xf32> to vector<8x128xbf16>
    %cst_49 = arith.constant dense<0.000000e+00> : vector<8x512xf32>
    %216 = tpu.matmul %215, %8, %cst_49 {dimension_numbers = #tpu.dot_dimension_numbers<[1], [0], [0], [1], [0, 0, 1, 1], [], []>} : vector<8x128xbf16>, vector<128x512xbf16>, vector<8x512xf32> -> vector<8x512xf32>
    %217 = arith.addf %214, %216 : vector<8x512xf32>
    %218 = vector.extract_strided_slice %217 {offsets = [0, 0], sizes = [8, 128], strides = [1, 1]} : vector<8x512xf32> to vector<8x128xf32>
    %219 = arith.negf %218 : vector<8x128xf32>
    %220 = math.exp %219 : vector<8x128xf32>
    %cst_50 = arith.constant 1.000000e+00 : f32
    %221 = vector.broadcast %cst_50 : f32 to vector<8x128xf32>
    %222 = arith.addf %221, %220 : vector<8x128xf32>
    %223 = arith.divf %221, %222 : vector<8x128xf32>
    %224 = vector.extract_strided_slice %217 {offsets = [0, 128], sizes = [8, 128], strides = [1, 1]} : vector<8x512xf32> to vector<8x128xf32>
    %225 = arith.negf %224 : vector<8x128xf32>
    %226 = math.exp %225 : vector<8x128xf32>
    %cst_51 = arith.constant 1.000000e+00 : f32
    %227 = vector.broadcast %cst_51 : f32 to vector<8x128xf32>
    %228 = arith.addf %227, %226 : vector<8x128xf32>
    %229 = arith.divf %227, %228 : vector<8x128xf32>
    %230 = vector.extract_strided_slice %217 {offsets = [0, 256], sizes = [8, 128], strides = [1, 1]} : vector<8x512xf32> to vector<8x128xf32>
    %231 = math.tanh %230 : vector<8x128xf32>
    %232 = vector.extract_strided_slice %217 {offsets = [0, 384], sizes = [8, 128], strides = [1, 1]} : vector<8x512xf32> to vector<8x128xf32>
    %233 = arith.negf %232 : vector<8x128xf32>
    %234 = math.exp %233 : vector<8x128xf32>
    %cst_52 = arith.constant 1.000000e+00 : f32
    %235 = vector.broadcast %cst_52 : f32 to vector<8x128xf32>
    %236 = arith.addf %235, %234 : vector<8x128xf32>
    %237 = arith.divf %235, %236 : vector<8x128xf32>
    %238 = arith.mulf %229, %211 : vector<8x128xf32>
    %239 = arith.mulf %223, %231 : vector<8x128xf32>
    %240 = arith.addf %238, %239 : vector<8x128xf32>
    %241 = math.tanh %240 : vector<8x128xf32>
    %242 = arith.mulf %237, %241 : vector<8x128xf32>
    %c0_53 = arith.constant 0 : index
    %c0_54 = arith.constant 0 : index
    %243 = vector.load %arg5[%c0_53, %c0_54] : memref<128x128xf32, #tpu.memory_space<vmem>>, vector<128x128xf32>
    %cst_55 = arith.constant dense<0.000000e+00> : vector<8x128xf32>
    %244 = tpu.matmul %242, %243, %cst_55 {dimension_numbers = #tpu.dot_dimension_numbers<[1], [0], [0], [1], [0, 0, 1, 1], [], []>} : vector<8x128xf32>, vector<128x128xf32>, vector<8x128xf32> -> vector<8x128xf32>
    %c0_56 = arith.constant 0 : index
    %c0_57 = arith.constant 0 : index
    %245 = vector.load %arg6[%c0_56, %c0_57] : memref<1x128xf32, #tpu.memory_space<vmem>>, vector<1x128xf32>
    %246 = vector.broadcast %245 : vector<1x128xf32> to vector<8x128xf32>
    %247 = arith.addf %244, %246 : vector<8x128xf32>
    %248 = math.tanh %247 : vector<8x128xf32>
    %c0_58 = arith.constant 0 : index
    %c0_59 = arith.constant 0 : index
    %249 = vector.load %arg7[%c0_58, %c0_59] : memref<128x128xf32, #tpu.memory_space<vmem>>, vector<128x128xf32>
    %cst_60 = arith.constant dense<0.000000e+00> : vector<8x128xf32>
    %250 = tpu.matmul %248, %249, %cst_60 {dimension_numbers = #tpu.dot_dimension_numbers<[1], [0], [0], [1], [0, 0, 1, 1], [], []>} : vector<8x128xf32>, vector<128x128xf32>, vector<8x128xf32> -> vector<8x128xf32>
    %c0_61 = arith.constant 0 : index
    %c0_62 = arith.constant 0 : index
    %251 = vector.load %arg8[%c0_61, %c0_62] : memref<1x128xf32, #tpu.memory_space<vmem>>, vector<1x128xf32>
    %252 = vector.broadcast %251 : vector<1x128xf32> to vector<8x128xf32>
    %253 = arith.addf %250, %252 : vector<8x128xf32>
    %254 = math.tanh %253 : vector<8x128xf32>
    %c0_63 = arith.constant 0 : index
    %c0_64 = arith.constant 0 : index
    %255 = vector.load %arg9[%c0_63, %c0_64] : memref<8x128xf32, #tpu.memory_space<vmem>>, vector<8x128xf32>
    tpu.vector_store %arg9[%c0_63, %c0_64], %254 {strides = array<i32>} : memref<8x128xf32, #tpu.memory_space<vmem>>, vector<8x128xf32>,
    return
  }
  func.func @transform_0(%arg0: i32) -> (i32, i32, i32) {
    %c0_i32 = arith.constant 0 : i32
    %c0_i32_0 = arith.constant 0 : i32
    %c0_i32_1 = arith.constant 0 : i32
    return %arg0, %c0_i32, %c0_i32_0 : i32, i32, i32
  }
  func.func @transform_1(%arg0: i32) -> (i32, i32) {
    %c0_i32 = arith.constant 0 : i32
    %c0_i32_0 = arith.constant 0 : i32
    %c0_i32_1 = arith.constant 0 : i32
    return %c0_i32, %c0_i32_0 : i32, i32
  }
  func.func @transform_2(%arg0: i32) -> (i32, i32) {
    %c0_i32 = arith.constant 0 : i32
    %c0_i32_0 = arith.constant 0 : i32
    %c0_i32_1 = arith.constant 0 : i32
    return %c0_i32, %c0_i32_0 : i32, i32
  }
  func.func @transform_3(%arg0: i32) -> (i32, i32) {
    %c0_i32 = arith.constant 0 : i32
    %c0_i32_0 = arith.constant 0 : i32
    %c0_i32_1 = arith.constant 0 : i32
    return %c0_i32, %c0_i32_0 : i32, i32
  }
  func.func @transform_4(%arg0: i32) -> (i32, i32) {
    %c0_i32 = arith.constant 0 : i32
    %c0_i32_0 = arith.constant 0 : i32
    %c0_i32_1 = arith.constant 0 : i32
    return %c0_i32, %c0_i32_0 : i32, i32
  }
  func.func @transform_5(%arg0: i32) -> (i32, i32) {
    %c0_i32 = arith.constant 0 : i32
    %c0_i32_0 = arith.constant 0 : i32
    %c0_i32_1 = arith.constant 0 : i32
    return %c0_i32, %c0_i32_0 : i32, i32
  }
  func.func @transform_6(%arg0: i32) -> (i32, i32) {
    %c0_i32 = arith.constant 0 : i32
    %c0_i32_0 = arith.constant 0 : i32
    %c0_i32_1 = arith.constant 0 : i32
    return %c0_i32, %c0_i32_0 : i32, i32
  }
  func.func @transform_7(%arg0: i32) -> (i32, i32) {
    %c0_i32 = arith.constant 0 : i32
    %c0_i32_0 = arith.constant 0 : i32
    %c0_i32_1 = arith.constant 0 : i32
    return %c0_i32, %c0_i32_0 : i32, i32
  }
  func.func @transform_8(%arg0: i32) -> (i32, i32) {
    %c0_i32 = arith.constant 0 : i32
    %c0_i32_0 = arith.constant 0 : i32
    return %arg0, %c0_i32 : i32, i32
  }
}

</mosaic_0001>

<llo_original>
// kernel: neg.1
$region0: #{neg.1}
  #allocation0 [shape = 's32[1]{0}', space=sflag, size = 0x4, scoped, tag = 'scoped memory for neg.1']
  %s0 = inlined_call_operand.vmem [shape: s32[2], index: 0, kind: input, shape index: {}]
  %s1 = inlined_call_operand.vmem [shape: s32[2], index: 1, kind: output, shape index: {}]
  %v2 = vld [vmem:[%s0] sm:$0x1]
  %3 = xla_tuple %v2
  %4 = xla_tuple %3
  %v5 = vsub.s32 0, %v2
  %6 = xla_tuple %v5
  %7 = vst [vmem:[%s1] sm:$0x1] %v5

// kernel: rnn_model_forward.1
$region0: #{rnn_model_forward.1}
  #allocation0 [shape = 'u32[]', space=smem, size = 0x4, offset = 0x4, fixed_abs, tag = 'smem constant byte address 0x4 - core index']
  #allocation1 [shape = 'u32[144,128]{1,0:T(1,128)}', space=vmem, size = 0x12000, scoped, tag = 'internal scratch']
  #allocation2 [shape = 'f32[64,512]{1,0:T(8,128)}', space=vmem, size = 0x20000, scoped, tag = 'scratch operand']
  %s0 = inlined_call_operand.vmem [shape: bf16[1,64,256], index: 0, kind: input, shape index: {}]
  %s1 = inlined_call_operand.vmem [shape: bf16[256,512], index: 1, kind: input, shape index: {}]
  %s2 = inlined_call_operand.vmem [shape: f32[1,512], index: 2, kind: input, shape index: {}]
  %s3 = inlined_call_operand.hbm [shape: bf16[128,512], index: 3, kind: input, shape index: {}]
  %s4 = inlined_call_operand.vmem [shape: f32[128,128], index: 4, kind: input, shape index: {}]
  %s5 = inlined_call_operand.vmem [shape: f32[1,128], index: 5, kind: input, shape index: {}]
  %s6 = inlined_call_operand.hbm [shape: f32[128,128], index: 6, kind: input, shape index: {}]
  %s7 = inlined_call_operand.vmem [shape: f32[1,128], index: 7, kind: input, shape index: {}]
  %s8 = inlined_call_operand.vmem [shape: f32[8,128], index: 8, kind: output, shape index: {}]
  %s9 = sld [smem:[#allocation0]]
  $region50: #{rnn_model_forward.1} parent=0
    _
  %s11 = ssub.s32 1, %s9
  %s12 = scalar_select 0, %s11, %s9
  $region1: #{rnn_model_forward.1} parent=0
    #allocation3 [shape = 'u8[131072]{0}', space=vmem, size = 0x20000, scoped, tag = 'input window, operand 3, single buffered']
    #allocation4 [shape = 's32[1]{0}', space=sflag, size = 0x4, scoped, tag = 'scoped memory for rnn_model_forward.1']
    #allocation5 [shape = 'u8[65536]{0}', space=vmem, size = 0x10000, scoped, tag = 'input window, operand 6, single buffered']
    #allocation6 [shape = 's32[1]{0}', space=sflag, size = 0x4, scoped, tag = 'scoped memory for rnn_model_forward.1']
    %13 = vsyncpa [#allocation4], 0
    %14 = vsyncpa [#allocation6], 0
    // Predicated region
    $region2: #{rnn_model_forward.1} parent=1 // pred_check
      _
    $region3: #{rnn_model_forward.1} parent=1 // pred_check_branch
      %16 = sbr.rel (0) target = $region5
    $region4: #{rnn_model_forward.1} parent=1 // pred_region
      _
    $region5: #{rnn_model_forward.1} parent=1 // pred_fallthru
      _
    // Predicated region
    $region6: #{rnn_model_forward.1} parent=1 // pred_check
      _
    $region7: #{rnn_model_forward.1} parent=1 // pred_check_branch
      %18 = sbr.rel (0) target = $region9
    $region8: #{rnn_model_forward.1} parent=1 // pred_region
      _
    $region9: #{rnn_model_forward.1} parent=1 // pred_fallthru
      _
    // Predicated region
    $region10: #{rnn_model_forward.1} parent=1 // pred_check
      _
    $region11: #{rnn_model_forward.1} parent=1 // pred_check_branch
      %20 = sbr.rel (0) target = $region13
    $region12: #{rnn_model_forward.1} parent=1 // pred_region
      _
    $region13: #{rnn_model_forward.1} parent=1 // pred_fallthru
      _
    // Predicated region
    $region14: #{rnn_model_forward.1} parent=1 // pred_check
      _
    $region15: #{rnn_model_forward.1} parent=1 // pred_check_branch
      %22 = sbr.rel (0) target = $region17
    $region16: #{rnn_model_forward.1} parent=1 // pred_region
      %s24 = ssub.s32 4096, 4096
      %25 = vsyncadd [#allocation4], %s24
      %s26 = sshll.u32 [#allocation3], 4
      %s27 = int_to_ptr.vmem [resolvable:$true] %s26
      %32 = dma.hbm_to_vmem [thread:$0]  %s3, 4096, %s27, [#allocation4], 256, 256, 16
    $region17: #{rnn_model_forward.1} parent=1 // pred_fallthru
      _
    // Predicated region
    $region18: #{rnn_model_forward.1} parent=1 // pred_check
      _
    $region19: #{rnn_model_forward.1} parent=1 // pred_check_branch
      %34 = sbr.rel (0) target = $region21
    $region20: #{rnn_model_forward.1} parent=1 // pred_region
      _
    $region21: #{rnn_model_forward.1} parent=1 // pred_fallthru
      _
    // Predicated region
    $region22: #{rnn_model_forward.1} parent=1 // pred_check
      _
    $region23: #{rnn_model_forward.1} parent=1 // pred_check_branch
      %36 = sbr.rel (0) target = $region25
    $region24: #{rnn_model_forward.1} parent=1 // pred_region
      _
    $region25: #{rnn_model_forward.1} parent=1 // pred_fallthru
      _
    // Predicated region
    $region26: #{rnn_model_forward.1} parent=1 // pred_check
      _
    $region27: #{rnn_model_forward.1} parent=1 // pred_check_branch
      %38 = sbr.rel (0) target = $region29
    $region28: #{rnn_model_forward.1} parent=1 // pred_region
      %s40 = ssub.s32 2048, 2048
      %41 = vsyncadd [#allocation6], %s40
      %s42 = sshll.u32 [#allocation5], 4
      %s43 = int_to_ptr.vmem [resolvable:$true] %s42
      %48 = dma.hbm_to_vmem [thread:$0]  %s6, 2048, %s43, [#allocation6], 128, 128, 8
    $region29: #{rnn_model_forward.1} parent=1 // pred_fallthru
      _
    // Predicated region
    $region30: #{rnn_model_forward.1} parent=1 // pred_check
      _
    $region31: #{rnn_model_forward.1} parent=1 // pred_check_branch
      %50 = sbr.rel (0) target = $region33
    $region32: #{rnn_model_forward.1} parent=1 // pred_region
      _
    $region33: #{rnn_model_forward.1} parent=1 // pred_fallthru
      _
    // Predicated region
    $region34: #{rnn_model_forward.1} parent=1 // pred_check
      _
    $region35: #{rnn_model_forward.1} parent=1 // pred_check_branch
      %52 = sbr.rel (0) target = $region37
    $region36: #{rnn_model_forward.1} parent=1 // pred_region
      %53 = dma.done [#allocation4], 4096
    $region37: #{rnn_model_forward.1} parent=1 // pred_fallthru
      _
    // Predicated region
    $region38: #{rnn_model_forward.1} parent=1 // pred_check
      _
    $region39: #{rnn_model_forward.1} parent=1 // pred_check_branch
      %55 = sbr.rel (0) target = $region41
    $region40: #{rnn_model_forward.1} parent=1 // pred_region
      %56 = dma.done [#allocation6], 2048
    $region41: #{rnn_model_forward.1} parent=1 // pred_fallthru
      _
    %v58 = vld [vmem:[%s0] sm:$0xff]
    %v59 = vld [vmem:[%s0 + $0x8] sm:$0xff]
    %v60 = vld [vmem:[%s0 + $0x10] sm:$0xff]
    %v61 = vld [vmem:[%s0 + $0x18] sm:$0xff]
    %v62 = vld [vmem:[%s0 + $0x20] sm:$0xff]
    %v63 = vld [vmem:[%s0 + $0x28] sm:$0xff]
    %v64 = vld [vmem:[%s0 + $0x30] sm:$0xff]
    %v65 = vld [vmem:[%s0 + $0x38] sm:$0xff]
    %v66 = vld [vmem:[%s1] sm:$0xff]
    %v67 = vld [vmem:[%s1 + $0x8] sm:$0xff]
    %v68 = vld [vmem:[%s1 + $0x10] sm:$0xff]
    %v69 = vld [vmem:[%s1 + $0x18] sm:$0xff]
    %v70 = vld [vmem:[%s1 + $0x20] sm:$0xff]
    %v71 = vld [vmem:[%s1 + $0x28] sm:$0xff]
    %v72 = vld [vmem:[%s1 + $0x30] sm:$0xff]
    %v73 = vld [vmem:[%s1 + $0x38] sm:$0xff]
    %v74 = vld [vmem:[%s1 + $0x40] sm:$0xff]
    %v75 = vld [vmem:[%s1 + $0x48] sm:$0xff]
    %v76 = vld [vmem:[%s1 + $0x50] sm:$0xff]
    %v77 = vld [vmem:[%s1 + $0x58] sm:$0xff]
    %v78 = vld [vmem:[%s1 + $0x60] sm:$0xff]
    %v79 = vld [vmem:[%s1 + $0x68] sm:$0xff]
    %v80 = vld [vmem:[%s1 + $0x70] sm:$0xff]
    %v81 = vld [vmem:[%s1 + $0x78] sm:$0xff]
    %v82 = vld [vmem:[%s1 + $0x80] sm:$0xff]
    %v83 = vld [vmem:[%s1 + $0x88] sm:$0xff]
    %v84 = vld [vmem:[%s1 + $0x90] sm:$0xff]
    %v85 = vld [vmem:[%s1 + $0x98] sm:$0xff]
    %v86 = vld [vmem:[%s1 + $0xa0] sm:$0xff]
    %v87 = vld [vmem:[%s1 + $0xa8] sm:$0xff]
    %v88 = vld [vmem:[%s1 + $0xb0] sm:$0xff]
    %v89 = vld [vmem:[%s1 + $0xb8] sm:$0xff]
    %v90 = vld [vmem:[%s1 + $0xc0] sm:$0xff]
    %v91 = vld [vmem:[%s1 + $0xc8] sm:$0xff]
    %v92 = vld [vmem:[%s1 + $0xd0] sm:$0xff]
    %v93 = vld [vmem:[%s1 + $0xd8] sm:$0xff]
    %v94 = vld [vmem:[%s1 + $0xe0] sm:$0xff]
    %v95 = vld [vmem:[%s1 + $0xe8] sm:$0xff]
    %v96 = vld [vmem:[%s1 + $0xf0] sm:$0xff]
    %v97 = vld [vmem:[%s1 + $0xf8] sm:$0xff]
    %v98 = vld [vmem:[%s1 + $0x100] sm:$0xff]
    %v99 = vld [vmem:[%s1 + $0x108] sm:$0xff]
    %v100 = vld [vmem:[%s1 + $0x110] sm:$0xff]
    %v101 = vld [vmem:[%s1 + $0x118] sm:$0xff]
    %v102 = vld [vmem:[%s1 + $0x120] sm:$0xff]
    %v103 = vld [vmem:[%s1 + $0x128] sm:$0xff]
    %v104 = vld [vmem:[%s1 + $0x130] sm:$0xff]
    %v105 = vld [vmem:[%s1 + $0x138] sm:$0xff]
    %v106 = vld [vmem:[%s1 + $0x140] sm:$0xff]
    %v107 = vld [vmem:[%s1 + $0x148] sm:$0xff]
    %v108 = vld [vmem:[%s1 + $0x150] sm:$0xff]
    %v109 = vld [vmem:[%s1 + $0x158] sm:$0xff]
    %v110 = vld [vmem:[%s1 + $0x160] sm:$0xff]
    %v111 = vld [vmem:[%s1 + $0x168] sm:$0xff]
    %v112 = vld [vmem:[%s1 + $0x170] sm:$0xff]
    %v113 = vld [vmem:[%s1 + $0x178] sm:$0xff]
    %v114 = vld [vmem:[%s1 + $0x180] sm:$0xff]
    %v115 = vld [vmem:[%s1 + $0x188] sm:$0xff]
    %v116 = vld [vmem:[%s1 + $0x190] sm:$0xff]
    %v117 = vld [vmem:[%s1 + $0x198] sm:$0xff]
    %v118 = vld [vmem:[%s1 + $0x1a0] sm:$0xff]
    %v119 = vld [vmem:[%s1 + $0x1a8] sm:$0xff]
    %v120 = vld [vmem:[%s1 + $0x1b0] sm:$0xff]
    %v121 = vld [vmem:[%s1 + $0x1b8] sm:$0xff]
    %v122 = vld [vmem:[%s1 + $0x1c0] sm:$0xff]
    %v123 = vld [vmem:[%s1 + $0x1c8] sm:$0xff]
    %v124 = vld [vmem:[%s1 + $0x1d0] sm:$0xff]
    %v125 = vld [vmem:[%s1 + $0x1d8] sm:$0xff]
    %v126 = vld [vmem:[%s1 + $0x1e0] sm:$0xff]
    %v127 = vld [vmem:[%s1 + $0x1e8] sm:$0xff]
    %v128 = vld [vmem:[%s1 + $0x1f0] sm:$0xff]
    %v129 = vld [vmem:[%s1 + $0x1f8] sm:$0xff]
    %v130 = vld [vmem:[%s2] sm:$0xf]
    %v132 = vlaneseq
    %v133 = vshrl.u32 %v132, 7
    %v134 = vsub.s32 0, %v133
    %v135 = vrot.slane %v130, %v134
    %v136 = vlaneseq
    %v137 = vshrl.u32 %v136, 7
    %v138 = vsub.s32 1, %v137
    %v139 = vrot.slane %v130, %v138
    %v140 = vlaneseq
    %v141 = vshrl.u32 %v140, 7
    %v142 = vsub.s32 2, %v141
    %v143 = vrot.slane %v130, %v142
    %v144 = vlaneseq
    %v145 = vshrl.u32 %v144, 7
    %v146 = vsub.s32 3, %v145
    %v147 = vrot.slane %v130, %v146
    %v160 = vunpack.c.l.b16 %v58
    %v161 = vunpack.c.h.b16 %v58
    %v162 = vunpack.c.l.b16 %v59
    %v163 = vunpack.c.h.b16 %v59
    %v164 = vunpack.c.l.b16 %v60
    %v165 = vunpack.c.h.b16 %v60
    %v166 = vunpack.c.l.b16 %v61
    %v167 = vunpack.c.h.b16 %v61
    %v168 = vunpack.c.l.b16 %v62
    %v169 = vunpack.c.h.b16 %v62
    %v170 = vunpack.c.l.b16 %v63
    %v171 = vunpack.c.h.b16 %v63
    %v172 = vunpack.c.l.b16 %v64
    %v173 = vunpack.c.h.b16 %v64
    %v174 = vunpack.c.l.b16 %v65
    %v175 = vunpack.c.h.b16 %v65
    %v176 = vpack.c.b16 %v162, %v160
    %v177 = vpack.c.b16 %v163, %v161
    %v178 = vpack.c.b16 %v166, %v164
    %v179 = vpack.c.b16 %v167, %v165
    %v180 = vpack.c.b16 %v170, %v168
    %v181 = vpack.c.b16 %v171, %v169
    %v182 = vpack.c.b16 %v174, %v172
    %v183 = vpack.c.b16 %v175, %v173
    %v256 = vunpack.c.l.b16 %v66
    %v257 = vunpack.c.h.b16 %v66
    %v258 = vunpack.c.l.b16 %v67
    %v259 = vunpack.c.h.b16 %v67
    %v260 = vunpack.c.l.b16 %v68
    %v261 = vunpack.c.h.b16 %v68
    %v262 = vunpack.c.l.b16 %v69
    %v263 = vunpack.c.h.b16 %v69
    %v264 = vunpack.c.l.b16 %v70
    %v265 = vunpack.c.h.b16 %v70
    %v266 = vunpack.c.l.b16 %v71
    %v267 = vunpack.c.h.b16 %v71
    %v268 = vunpack.c.l.b16 %v72
    %v269 = vunpack.c.h.b16 %v72
    %v270 = vunpack.c.l.b16 %v73
    %v271 = vunpack.c.h.b16 %v73
    %v272 = vunpack.c.l.b16 %v74
    %v273 = vunpack.c.h.b16 %v74
    %v274 = vunpack.c.l.b16 %v75
    %v275 = vunpack.c.h.b16 %v75
    %v276 = vunpack.c.l.b16 %v76
    %v277 = vunpack.c.h.b16 %v76
    %v278 = vunpack.c.l.b16 %v77
    %v279 = vunpack.c.h.b16 %v77
    %v280 = vunpack.c.l.b16 %v78
    %v281 = vunpack.c.h.b16 %v78
    %v282 = vunpack.c.l.b16 %v79
    %v283 = vunpack.c.h.b16 %v79
    %v284 = vunpack.c.l.b16 %v80
    %v285 = vunpack.c.h.b16 %v80
    %v286 = vunpack.c.l.b16 %v81
    %v287 = vunpack.c.h.b16 %v81
    %v288 = vunpack.c.l.b16 %v82
    %v289 = vunpack.c.h.b16 %v82
    %v290 = vunpack.c.l.b16 %v83
    %v291 = vunpack.c.h.b16 %v83
    %v292 = vunpack.c.l.b16 %v84
    %v293 = vunpack.c.h.b16 %v84
    %v294 = vunpack.c.l.b16 %v85
    %v295 = vunpack.c.h.b16 %v85
    %v296 = vunpack.c.l.b16 %v86
    %v297 = vunpack.c.h.b16 %v86
    %v298 = vunpack.c.l.b16 %v87
    %v299 = vunpack.c.h.b16 %v87
    %v300 = vunpack.c.l.b16 %v88
    %v301 = vunpack.c.h.b16 %v88
    %v302 = vunpack.c.l.b16 %v89
    %v303 = vunpack.c.h.b16 %v89
    %v304 = vunpack.c.l.b16 %v90
    %v305 = vunpack.c.h.b16 %v90
    %v306 = vunpack.c.l.b16 %v91
    %v307 = vunpack.c.h.b16 %v91
    %v308 = vunpack.c.l.b16 %v92
    %v309 = vunpack.c.h.b16 %v92
    %v310 = vunpack.c.l.b16 %v93
    %v311 = vunpack.c.h.b16 %v93
    %v312 = vunpack.c.l.b16 %v94
    %v313 = vunpack.c.h.b16 %v94
    %v314 = vunpack.c.l.b16 %v95
    %v315 = vunpack.c.h.b16 %v95
    %v316 = vunpack.c.l.b16 %v96
    %v317 = vunpack.c.h.b16 %v96
    %v318 = vunpack.c.l.b16 %v97
    %v319 = vunpack.c.h.b16 %v97
    %v320 = vunpack.c.l.b16 %v98
    %v321 = vunpack.c.h.b16 %v98
    %v322 = vunpack.c.l.b16 %v99
    %v323 = vunpack.c.h.b16 %v99
    %v324 = vunpack.c.l.b16 %v100
    %v325 = vunpack.c.h.b16 %v100
    %v326 = vunpack.c.l.b16 %v101
    %v327 = vunpack.c.h.b16 %v101
    %v328 = vunpack.c.l.b16 %v102
    %v329 = vunpack.c.h.b16 %v102
    %v330 = vunpack.c.l.b16 %v103
    %v331 = vunpack.c.h.b16 %v103
    %v332 = vunpack.c.l.b16 %v104
    %v333 = vunpack.c.h.b16 %v104
    %v334 = vunpack.c.l.b16 %v105
    %v335 = vunpack.c.h.b16 %v105
    %v336 = vunpack.c.l.b16 %v106
    %v337 = vunpack.c.h.b16 %v106
    %v338 = vunpack.c.l.b16 %v107
    %v339 = vunpack.c.h.b16 %v107
    %v340 = vunpack.c.l.b16 %v108
    %v341 = vunpack.c.h.b16 %v108
    %v342 = vunpack.c.l.b16 %v109
    %v343 = vunpack.c.h.b16 %v109
    %v344 = vunpack.c.l.b16 %v110
    %v345 = vunpack.c.h.b16 %v110
    %v346 = vunpack.c.l.b16 %v111
    %v347 = vunpack.c.h.b16 %v111
    %v348 = vunpack.c.l.b16 %v112
    %v349 = vunpack.c.h.b16 %v112
    %v350 = vunpack.c.l.b16 %v113
    %v351 = vunpack.c.h.b16 %v113
    %v352 = vunpack.c.l.b16 %v114
    %v353 = vunpack.c.h.b16 %v114
    %v354 = vunpack.c.l.b16 %v115
    %v355 = vunpack.c.h.b16 %v115
    %v356 = vunpack.c.l.b16 %v116
    %v357 = vunpack.c.h.b16 %v116
    %v358 = vunpack.c.l.b16 %v117
    %v359 = vunpack.c.h.b16 %v117
    %v360 = vunpack.c.l.b16 %v118
    %v361 = vunpack.c.h.b16 %v118
    %v362 = vunpack.c.l.b16 %v119
    %v363 = vunpack.c.h.b16 %v119
    %v364 = vunpack.c.l.b16 %v120
    %v365 = vunpack.c.h.b16 %v120
    %v366 = vunpack.c.l.b16 %v121
    %v367 = vunpack.c.h.b16 %v121
    %v368 = vunpack.c.l.b16 %v122
    %v369 = vunpack.c.h.b16 %v122
    %v370 = vunpack.c.l.b16 %v123
    %v371 = vunpack.c.h.b16 %v123
    %v372 = vunpack.c.l.b16 %v124
    %v373 = vunpack.c.h.b16 %v124
    %v374 = vunpack.c.l.b16 %v125
    %v375 = vunpack.c.h.b16 %v125
    %v376 = vunpack.c.l.b16 %v126
    %v377 = vunpack.c.h.b16 %v126
    %v378 = vunpack.c.l.b16 %v127
    %v379 = vunpack.c.h.b16 %v127
    %v380 = vunpack.c.l.b16 %v128
    %v381 = vunpack.c.h.b16 %v128
    %v382 = vunpack.c.l.b16 %v129
    %v383 = vunpack.c.h.b16 %v129
    %v384 = vpack.c.b16 %v260, %v256
    %v385 = vpack.c.b16 %v261, %v257
    %v386 = vpack.c.b16 %v262, %v258
    %v387 = vpack.c.b16 %v263, %v259
    %v388 = vpack.c.b16 %v268, %v264
    %v389 = vpack.c.b16 %v269, %v265
    %v390 = vpack.c.b16 %v270, %v266
    %v391 = vpack.c.b16 %v271, %v267
    %v392 = vpack.c.b16 %v276, %v272
    %v393 = vpack.c.b16 %v277, %v273
    %v394 = vpack.c.b16 %v278, %v274
    %v395 = vpack.c.b16 %v279, %v275
    %v396 = vpack.c.b16 %v284, %v280
    %v397 = vpack.c.b16 %v285, %v281
    %v398 = vpack.c.b16 %v286, %v282
    %v399 = vpack.c.b16 %v287, %v283
    %v400 = vpack.c.b16 %v292, %v288
    %v401 = vpack.c.b16 %v293, %v289
    %v402 = vpack.c.b16 %v294, %v290
    %v403 = vpack.c.b16 %v295, %v291
    %v404 = vpack.c.b16 %v300, %v296
    %v405 = vpack.c.b16 %v301, %v297
    %v406 = vpack.c.b16 %v302, %v298
    %v407 = vpack.c.b16 %v303, %v299
    %v408 = vpack.c.b16 %v308, %v304
    %v409 = vpack.c.b16 %v309, %v305
    %v410 = vpack.c.b16 %v310, %v306
    %v411 = vpack.c.b16 %v311, %v307
    %v412 = vpack.c.b16 %v316, %v312
    %v413 = vpack.c.b16 %v317, %v313
    %v414 = vpack.c.b16 %v318, %v314
    %v415 = vpack.c.b16 %v319, %v315
    %v416 = vpack.c.b16 %v324, %v320
    %v417 = vpack.c.b16 %v325, %v321
    %v418 = vpack.c.b16 %v326, %v322
    %v419 = vpack.c.b16 %v327, %v323
    %v420 = vpack.c.b16 %v332, %v328
    %v421 = vpack.c.b16 %v333, %v329
    %v422 = vpack.c.b16 %v334, %v330
    %v423 = vpack.c.b16 %v335, %v331
    %v424 = vpack.c.b16 %v340, %v336
    %v425 = vpack.c.b16 %v341, %v337
    %v426 = vpack.c.b16 %v342, %v338
    %v427 = vpack.c.b16 %v343, %v339
    %v428 = vpack.c.b16 %v348, %v344
    %v429 = vpack.c.b16 %v349, %v345
    %v430 = vpack.c.b16 %v350, %v346
    %v431 = vpack.c.b16 %v351, %v347
    %v432 = vpack.c.b16 %v356, %v352
    %v433 = vpack.c.b16 %v357, %v353
    %v434 = vpack.c.b16 %v358, %v354
    %v435 = vpack.c.b16 %v359, %v355
    %v436 = vpack.c.b16 %v364, %v360
    %v437 = vpack.c.b16 %v365, %v361
    %v438 = vpack.c.b16 %v366, %v362
    %v439 = vpack.c.b16 %v367, %v363
    %v440 = vpack.c.b16 %v372, %v368
    %v441 = vpack.c.b16 %v373, %v369
    %v442 = vpack.c.b16 %v374, %v370
    %v443 = vpack.c.b16 %v375, %v371
    %v444 = vpack.c.b16 %v380, %v376
    %v445 = vpack.c.b16 %v381, %v377
    %v446 = vpack.c.b16 %v382, %v378
    %v447 = vpack.c.b16 %v383, %v379
    %512 = vmatprep.subr.bf16.mxu0 %v385
    %513 = vmatpush1.bf16.msra.mxu0 %v384
    %514 = vmatprep.subr.bf16.mxu0 %v389
    %515 = vmatpush1.bf16.msra.mxu0 %v388
    %516 = vmatprep.subr.bf16.mxu0 %v393
    %517 = vmatpush1.bf16.msra.mxu0 %v392
    %518 = vmatprep.subr.bf16.mxu0 %v397
    %519 = vmatpush1.bf16.msra.mxu0 %v396
    %520 = vmatprep.subr.bf16.mxu0 %v401
    %521 = vmatpush1.bf16.msra.mxu0 %v400
    %522 = vmatprep.subr.bf16.mxu0 %v405
    %523 = vmatpush1.bf16.msra.mxu0 %v404
    %524 = vmatprep.subr.bf16.mxu0 %v409
    %525 = vmatpush1.bf16.msra.mxu0 %v408
    %526 = vmatprep.subr.bf16.mxu0 %v413
    %527 = vmatpush1.bf16.msra.mxu0 %v412
    %528 = vmatprep.subr.bf16.mxu0 %v417
    %529 = vmatpush1.bf16.msra.mxu0 %v416
    %530 = vmatprep.subr.bf16.mxu0 %v421
    %531 = vmatpush1.bf16.msra.mxu0 %v420
    %532 = vmatprep.subr.bf16.mxu0 %v425
    %533 = vmatpush1.bf16.msra.mxu0 %v424
    %534 = vmatprep.subr.bf16.mxu0 %v429
    %535 = vmatpush1.bf16.msra.mxu0 %v428
    %536 = vmatprep.subr.bf16.mxu0 %v433
    %537 = vmatpush1.bf16.msra.mxu0 %v432
    %538 = vmatprep.subr.bf16.mxu0 %v437
    %539 = vmatpush1.bf16.msra.mxu0 %v436
    %540 = vmatprep.subr.bf16.mxu0 %v441
    %541 = vmatpush1.bf16.msra.mxu0 %v440
    %542 = vmatprep.subr.bf16.mxu0 %v445
    %543 = vmatpush1.bf16.msra.mxu0 %v444
    %544 = vmatprep.mubr.bf16.mxu0 %v177
    %545 = vmatmul.mubr.bf16.gmra.mrb[0].mxu0 %v176
    %v546 = vpop.f32.mrb[0].mxu0
    %v547 = vadd.f32 %v135, %v546
    %v548 = vpop.f32.mrb[0].mxu0
    %v549 = vadd.f32 %v139, %v548
    %v550 = vpop.f32.mrb[0].mxu0
    %v551 = vadd.f32 %v135, %v550
    %v552 = vpop.f32.mrb[0].mxu0
    %v553 = vadd.f32 %v139, %v552
    %554 = vmatprep.mubr.bf16.mxu0 %v179
    %555 = vmatmul.mubr.bf16.gmra.mrb[0].mxu0 %v178
    %v556 = vpop.f32.mrb[0].mxu0
    %v557 = vadd.f32 %v135, %v556
    %v558 = vpop.f32.mrb[0].mxu0
    %v559 = vadd.f32 %v139, %v558
    %v560 = vpop.f32.mrb[0].mxu0
    %v561 = vadd.f32 %v135, %v560
    %v562 = vpop.f32.mrb[0].mxu0
    %v563 = vadd.f32 %v139, %v562
    %564 = vmatprep.mubr.bf16.mxu0 %v181
    %565 = vmatmul.mubr.bf16.gmra.mrb[0].mxu0 %v180
    %v566 = vpop.f32.mrb[0].mxu0
    %v567 = vadd.f32 %v135, %v566
    %v568 = vpop.f32.mrb[0].mxu0
    %v569 = vadd.f32 %v139, %v568
    %v570 = vpop.f32.mrb[0].mxu0
    %v571 = vadd.f32 %v135, %v570
    %v572 = vpop.f32.mrb[0].mxu0
    %v573 = vadd.f32 %v139, %v572
    %574 = vmatprep.mubr.bf16.mxu0 %v183
    %575 = vmatmul.mubr.bf16.gmra.mrb[0].mxu0 %v182
    %v576 = vpop.f32.mrb[0].mxu0
    %v577 = vadd.f32 %v135, %v576
    %v578 = vpop.f32.mrb[0].mxu0
    %v579 = vadd.f32 %v139, %v578
    %v580 = vpop.f32.mrb[0].mxu0
    %v581 = vadd.f32 %v135, %v580
    %v582 = vpop.f32.mrb[0].mxu0
    %v583 = vadd.f32 %v139, %v582
    %584 = vdwg.mxu0
    %585 = vmatprep.subr.bf16.mxu0 %v387
    %586 = vmatpush1.bf16.msra.mxu0 %v386
    %587 = vmatprep.subr.bf16.mxu0 %v391
    %588 = vmatpush1.bf16.msra.mxu0 %v390
    %589 = vmatprep.subr.bf16.mxu0 %v395
    %590 = vmatpush1.bf16.msra.mxu0 %v394
    %591 = vmatprep.subr.bf16.mxu0 %v399
    %592 = vmatpush1.bf16.msra.mxu0 %v398
    %593 = vmatprep.subr.bf16.mxu0 %v403
    %594 = vmatpush1.bf16.msra.mxu0 %v402
    %595 = vmatprep.subr.bf16.mxu0 %v407
    %596 = vmatpush1.bf16.msra.mxu0 %v406
    %597 = vmatprep.subr.bf16.mxu0 %v411
    %598 = vmatpush1.bf16.msra.mxu0 %v410
    %599 = vmatprep.subr.bf16.mxu0 %v415
    %600 = vmatpush1.bf16.msra.mxu0 %v414
    %601 = vmatprep.subr.bf16.mxu0 %v419
    %602 = vmatpush1.bf16.msra.mxu0 %v418
    %603 = vmatprep.subr.bf16.mxu0 %v423
    %604 = vmatpush1.bf16.msra.mxu0 %v422
    %605 = vmatprep.subr.bf16.mxu0 %v427
    %606 = vmatpush1.bf16.msra.mxu0 %v426
    %607 = vmatprep.subr.bf16.mxu0 %v431
    %608 = vmatpush1.bf16.msra.mxu0 %v430
    %609 = vmatprep.subr.bf16.mxu0 %v435
    %610 = vmatpush1.bf16.msra.mxu0 %v434
    %611 = vmatprep.subr.bf16.mxu0 %v439
    %612 = vmatpush1.bf16.msra.mxu0 %v438
    %613 = vmatprep.subr.bf16.mxu0 %v443
    %614 = vmatpush1.bf16.msra.mxu0 %v442
    %615 = vmatprep.subr.bf16.mxu0 %v447
    %616 = vmatpush1.bf16.msra.mxu0 %v446
    %617 = vmatprep.mubr.bf16.mxu0 %v177
    %618 = vmatmul.mubr.bf16.gmra.mrb[0].mxu0 %v176
    %v619 = vpop.f32.mrb[0].mxu0
    %v620 = vadd.f32 %v143, %v619
    %v621 = vpop.f32.mrb[0].mxu0
    %v622 = vadd.f32 %v147, %v621
    %v623 = vpop.f32.mrb[0].mxu0
    %v624 = vadd.f32 %v143, %v623
    %v625 = vpop.f32.mrb[0].mxu0
    %v626 = vadd.f32 %v147, %v625
    %627 = vmatprep.mubr.bf16.mxu0 %v179
    %628 = vmatmul.mubr.bf16.gmra.mrb[0].mxu0 %v178
    %v629 = vpop.f32.mrb[0].mxu0
    %v630 = vadd.f32 %v143, %v629
    %v631 = vpop.f32.mrb[0].mxu0
    %v632 = vadd.f32 %v147, %v631
    %v633 = vpop.f32.mrb[0].mxu0
    %v634 = vadd.f32 %v143, %v633
    %v635 = vpop.f32.mrb[0].mxu0
    %v636 = vadd.f32 %v147, %v635
    %637 = vmatprep.mubr.bf16.mxu0 %v181
    %638 = vmatmul.mubr.bf16.gmra.mrb[0].mxu0 %v180
    %v639 = vpop.f32.mrb[0].mxu0
    %v640 = vadd.f32 %v143, %v639
    %v641 = vpop.f32.mrb[0].mxu0
    %v642 = vadd.f32 %v147, %v641
    %v643 = vpop.f32.mrb[0].mxu0
    %v644 = vadd.f32 %v143, %v643
    %v645 = vpop.f32.mrb[0].mxu0
    %v646 = vadd.f32 %v147, %v645
    %647 = vmatprep.mubr.bf16.mxu0 %v183
    %648 = vmatmul.mubr.bf16.gmra.mrb[0].mxu0 %v182
    %v649 = vpop.f32.mrb[0].mxu0
    %v650 = vadd.f32 %v143, %v649
    %v651 = vpop.f32.mrb[0].mxu0
    %v652 = vadd.f32 %v147, %v651
    %v653 = vpop.f32.mrb[0].mxu0
    %v654 = vadd.f32 %v143, %v653
    %v655 = vpop.f32.mrb[0].mxu0
    %v656 = vadd.f32 %v147, %v655
    %657 = vdwg.mxu0
    %658 = vst [vmem:[#allocation2] sm:$0xff] %v547
    %659 = vst [vmem:[#allocation2 + $0x8] sm:$0xff] %v549
    %660 = vst [vmem:[#allocation2 + $0x10] sm:$0xff] %v620
    %661 = vst [vmem:[#allocation2 + $0x18] sm:$0xff] %v622
    %662 = vst [vmem:[#allocation2 + $0x20] sm:$0xff] %v551
    %663 = vst [vmem:[#allocation2 + $0x28] sm:$0xff] %v553
    %664 = vst [vmem:[#allocation2 + $0x30] sm:$0xff] %v624
    %665 = vst [vmem:[#allocation2 + $0x38] sm:$0xff] %v626
    %666 = vst [vmem:[#allocation2 + $0x40] sm:$0xff] %v557
    %667 = vst [vmem:[#allocation2 + $0x48] sm:$0xff] %v559
    %668 = vst [vmem:[#allocation2 + $0x50] sm:$0xff] %v630
    %669 = vst [vmem:[#allocation2 + $0x58] sm:$0xff] %v632
    %670 = vst [vmem:[#allocation2 + $0x60] sm:$0xff] %v561
    %671 = vst [vmem:[#allocation2 + $0x68] sm:$0xff] %v563
    %672 = vst [vmem:[#allocation2 + $0x70] sm:$0xff] %v634
    %673 = vst [vmem:[#allocation2 + $0x78] sm:$0xff] %v636
    %674 = vst [vmem:[#allocation2 + $0x80] sm:$0xff] %v567
    %675 = vst [vmem:[#allocation2 + $0x88] sm:$0xff] %v569
    %676 = vst [vmem:[#allocation2 + $0x90] sm:$0xff] %v640
    %677 = vst [vmem:[#allocation2 + $0x98] sm:$0xff] %v642
    %678 = vst [vmem:[#allocation2 + $0xa0] sm:$0xff] %v571
    %679 = vst [vmem:[#allocation2 + $0xa8] sm:$0xff] %v573
    %680 = vst [vmem:[#allocation2 + $0xb0] sm:$0xff] %v644
    %681 = vst [vmem:[#allocation2 + $0xb8] sm:$0xff] %v646
    %682 = vst [vmem:[#allocation2 + $0xc0] sm:$0xff] %v577
    %683 = vst [vmem:[#allocation2 + $0xc8] sm:$0xff] %v579
    %684 = vst [vmem:[#allocation2 + $0xd0] sm:$0xff] %v650
    %685 = vst [vmem:[#allocation2 + $0xd8] sm:$0xff] %v652
    %686 = vst [vmem:[#allocation2 + $0xe0] sm:$0xff] %v581
    %687 = vst [vmem:[#allocation2 + $0xe8] sm:$0xff] %v583
    %688 = vst [vmem:[#allocation2 + $0xf0] sm:$0xff] %v654
    %689 = vst [vmem:[#allocation2 + $0xf8] sm:$0xff] %v656
    %v690 = vld [vmem:[#allocation3] sm:$0xff]
    %v691 = vld [vmem:[#allocation3 + $0x8] sm:$0xff]
    %v692 = vld [vmem:[#allocation3 + $0x10] sm:$0xff]
    %v693 = vld [vmem:[#allocation3 + $0x18] sm:$0xff]
    %v694 = vld [vmem:[#allocation3 + $0x20] sm:$0xff]
    %v695 = vld [vmem:[#allocation3 + $0x28] sm:$0xff]
    %v696 = vld [vmem:[#allocation3 + $0x30] sm:$0xff]
    %v697 = vld [vmem:[#allocation3 + $0x38] sm:$0xff]
    %v698 = vld [vmem:[#allocation3 + $0x40] sm:$0xff]
    %v699 = vld [vmem:[#allocation3 + $0x48] sm:$0xff]
    %v700 = vld [vmem:[#allocation3 + $0x50] sm:$0xff]
    %v701 = vld [vmem:[#allocation3 + $0x58] sm:$0xff]
    %v702 = vld [vmem:[#allocation3 + $0x60] sm:$0xff]
    %v703 = vld [vmem:[#allocation3 + $0x68] sm:$0xff]
    %v704 = vld [vmem:[#allocation3 + $0x70] sm:$0xff]
    %v705 = vld [vmem:[#allocation3 + $0x78] sm:$0xff]
    %v706 = vld [vmem:[#allocation3 + $0x80] sm:$0xff]
    %v707 = vld [vmem:[#allocation3 + $0x88] sm:$0xff]
    %v708 = vld [vmem:[#allocation3 + $0x90] sm:$0xff]
    %v709 = vld [vmem:[#allocation3 + $0x98] sm:$0xff]
    %v710 = vld [vmem:[#allocation3 + $0xa0] sm:$0xff]
    %v711 = vld [vmem:[#allocation3 + $0xa8] sm:$0xff]
    %v712 = vld [vmem:[#allocation3 + $0xb0] sm:$0xff]
    %v713 = vld [vmem:[#allocation3 + $0xb8] sm:$0xff]
    %v714 = vld [vmem:[#allocation3 + $0xc0] sm:$0xff]
    %v715 = vld [vmem:[#allocation3 + $0xc8] sm:$0xff]
    %v716 = vld [vmem:[#allocation3 + $0xd0] sm:$0xff]
    %v717 = vld [vmem:[#allocation3 + $0xd8] sm:$0xff]
    %v718 = vld [vmem:[#allocation3 + $0xe0] sm:$0xff]
    %v719 = vld [vmem:[#allocation3 + $0xe8] sm:$0xff]
    %v720 = vld [vmem:[#allocation3 + $0xf0] sm:$0xff]
    %v721 = vld [vmem:[#allocation3 + $0xf8] sm:$0xff]
    %v722 = vld [vmem:[#allocation2] sm:$0xff]
    %v723 = vld [vmem:[#allocation2 + $0x8] sm:$0xff]
    %v724 = vld [vmem:[#allocation2 + $0x10] sm:$0xff]
    %v725 = vld [vmem:[#allocation2 + $0x18] sm:$0xff]
    %v758 = vunpack.c.l.b16 %v690
    %v759 = vunpack.c.h.b16 %v690
    %v760 = vunpack.c.l.b16 %v691
    %v761 = vunpack.c.h.b16 %v691
    %v762 = vunpack.c.l.b16 %v692
    %v763 = vunpack.c.h.b16 %v692
    %v764 = vunpack.c.l.b16 %v693
    %v765 = vunpack.c.h.b16 %v693
    %v766 = vunpack.c.l.b16 %v694
    %v767 = vunpack.c.h.b16 %v694
    %v768 = vunpack.c.l.b16 %v695
    %v769 = vunpack.c.h.b16 %v695
    %v770 = vunpack.c.l.b16 %v696
    %v771 = vunpack.c.h.b16 %v696
    %v772 = vunpack.c.l.b16 %v697
    %v773 = vunpack.c.h.b16 %v697
    %v774 = vunpack.c.l.b16 %v698
    %v775 = vunpack.c.h.b16 %v698
    %v776 = vunpack.c.l.b16 %v699
    %v777 = vunpack.c.h.b16 %v699
    %v778 = vunpack.c.l.b16 %v700
    %v779 = vunpack.c.h.b16 %v700
    %v780 = vunpack.c.l.b16 %v701
    %v781 = vunpack.c.h.b16 %v701
    %v782 = vunpack.c.l.b16 %v702
    %v783 = vunpack.c.h.b16 %v702
    %v784 = vunpack.c.l.b16 %v703
    %v785 = vunpack.c.h.b16 %v703
    %v786 = vunpack.c.l.b16 %v704
    %v787 = vunpack.c.h.b16 %v704
    %v788 = vunpack.c.l.b16 %v705
    %v789 = vunpack.c.h.b16 %v705
    %v790 = vunpack.c.l.b16 %v706
    %v791 = vunpack.c.h.b16 %v706
    %v792 = vunpack.c.l.b16 %v707
    %v793 = vunpack.c.h.b16 %v707
    %v794 = vunpack.c.l.b16 %v708
    %v795 = vunpack.c.h.b16 %v708
    %v796 = vunpack.c.l.b16 %v709
    %v797 = vunpack.c.h.b16 %v709
    %v798 = vunpack.c.l.b16 %v710
    %v799 = vunpack.c.h.b16 %v710
    %v800 = vunpack.c.l.b16 %v711
    %v801 = vunpack.c.h.b16 %v711
    %v802 = vunpack.c.l.b16 %v712
    %v803 = vunpack.c.h.b16 %v712
    %v804 = vunpack.c.l.b16 %v713
    %v805 = vunpack.c.h.b16 %v713
    %v806 = vunpack.c.l.b16 %v714
    %v807 = vunpack.c.h.b16 %v714
    %v808 = vunpack.c.l.b16 %v715
    %v809 = vunpack.c.h.b16 %v715
    %v810 = vunpack.c.l.b16 %v716
    %v811 = vunpack.c.h.b16 %v716
    %v812 = vunpack.c.l.b16 %v717
    %v813 = vunpack.c.h.b16 %v717
    %v814 = vunpack.c.l.b16 %v718
    %v815 = vunpack.c.h.b16 %v718
    %v816 = vunpack.c.l.b16 %v719
    %v817 = vunpack.c.h.b16 %v719
    %v818 = vunpack.c.l.b16 %v720
    %v819 = vunpack.c.h.b16 %v720
    %v820 = vunpack.c.l.b16 %v721
    %v821 = vunpack.c.h.b16 %v721
    %v822 = vpack.c.b16 %v762, %v758
    %v823 = vpack.c.b16 %v763, %v759
    %v824 = vpack.c.b16 %v764, %v760
    %v825 = vpack.c.b16 %v765, %v761
    %v826 = vpack.c.b16 %v770, %v766
    %v827 = vpack.c.b16 %v771, %v767
    %v828 = vpack.c.b16 %v772, %v768
    %v829 = vpack.c.b16 %v773, %v769
    %v830 = vpack.c.b16 %v778, %v774
    %v831 = vpack.c.b16 %v779, %v775
    %v832 = vpack.c.b16 %v780, %v776
    %v833 = vpack.c.b16 %v781, %v777
    %v834 = vpack.c.b16 %v786, %v782
    %v835 = vpack.c.b16 %v787, %v783
    %v836 = vpack.c.b16 %v788, %v784
    %v837 = vpack.c.b16 %v789, %v785
    %v838 = vpack.c.b16 %v794, %v790
    %v839 = vpack.c.b16 %v795, %v791
    %v840 = vpack.c.b16 %v796, %v792
    %v841 = vpack.c.b16 %v797, %v793
    %v842 = vpack.c.b16 %v802, %v798
    %v843 = vpack.c.b16 %v803, %v799
    %v844 = vpack.c.b16 %v804, %v800
    %v845 = vpack.c.b16 %v805, %v801
    %v846 = vpack.c.b16 %v810, %v806
    %v847 = vpack.c.b16 %v811, %v807
    %v848 = vpack.c.b16 %v812, %v808
    %v849 = vpack.c.b16 %v813, %v809
    %v850 = vpack.c.b16 %v818, %v814
    %v851 = vpack.c.b16 %v819, %v815
    %v852 = vpack.c.b16 %v820, %v816
    %v853 = vpack.c.b16 %v821, %v817
    %886 = vmatprep.subr.bf16.mxu0 %v823
    %887 = vmatpush1.bf16.msra.mxu0 %v822
    %888 = vmatprep.subr.bf16.mxu0 %v827
    %889 = vmatpush1.bf16.msra.mxu0 %v826
    %890 = vmatprep.subr.bf16.mxu0 %v831
    %891 = vmatpush1.bf16.msra.mxu0 %v830
    %892 = vmatprep.subr.bf16.mxu0 %v835
    %893 = vmatpush1.bf16.msra.mxu0 %v834
    %894 = vmatprep.subr.bf16.mxu0 %v839
    %895 = vmatpush1.bf16.msra.mxu0 %v838
    %896 = vmatprep.subr.bf16.mxu0 %v843
    %897 = vmatpush1.bf16.msra.mxu0 %v842
    %898 = vmatprep.subr.bf16.mxu0 %v847
    %899 = vmatpush1.bf16.msra.mxu0 %v846
    %900 = vmatprep.subr.bf16.mxu0 %v851
    %901 = vmatpush1.bf16.msra.mxu0 %v850
    %902 = vmatprep.subr.bf16.mxu0 0
    %903 = vmatpush1.bf16.msra.mxu0 0
    %904 = vmatprep.subr.bf16.mxu0 0
    %905 = vmatpush1.bf16.msra.mxu0 0
    %906 = vmatprep.subr.bf16.mxu0 0
    %907 = vmatpush1.bf16.msra.mxu0 0
    %908 = vmatprep.subr.bf16.mxu0 0
    %909 = vmatpush1.bf16.msra.mxu0 0
    %910 = vmatprep.subr.bf16.mxu0 0
    %911 = vmatpush1.bf16.msra.mxu0 0
    %912 = vmatprep.subr.bf16.mxu0 0
    %913 = vmatpush1.bf16.msra.mxu0 0
    %914 = vmatprep.subr.bf16.mxu0 0
    %915 = vmatpush1.bf16.msra.mxu0 0
    %916 = vmatprep.subr.bf16.mxu0 0
    %917 = vmatpush1.bf16.msra.mxu0 0
    %918 = vmatprep.mubr.bf16.mxu0 0
    %919 = vmatmul.mubr.bf16.gmra.mrb[0].mxu0 0
    %v920 = vpop.f32.mrb[0].mxu0
    %v921 = vadd.f32 0.0, %v920
    %v922 = vpop.f32.mrb[0].mxu0
    %v923 = vadd.f32 0.0, %v922
    %v924 = vpop.f32.mrb[0].mxu0
    %v925 = vpop.f32.mrb[0].mxu0
    %926 = vdwg.mxu0
    %927 = vmatprep.subr.bf16.mxu0 %v825
    %928 = vmatpush1.bf16.msra.mxu0 %v824
    %929 = vmatprep.subr.bf16.mxu0 %v829
    %930 = vmatpush1.bf16.msra.mxu0 %v828
    %931 = vmatprep.subr.bf16.mxu0 %v833
    %932 = vmatpush1.bf16.msra.mxu0 %v832
    %933 = vmatprep.subr.bf16.mxu0 %v837
    %934 = vmatpush1.bf16.msra.mxu0 %v836
    %935 = vmatprep.subr.bf16.mxu0 %v841
    %936 = vmatpush1.bf16.msra.mxu0 %v840
    %937 = vmatprep.subr.bf16.mxu0 %v845
    %938 = vmatpush1.bf16.msra.mxu0 %v844
    %939 = vmatprep.subr.bf16.mxu0 %v849
    %940 = vmatpush1.bf16.msra.mxu0 %v848
    %941 = vmatprep.subr.bf16.mxu0 %v853
    %942 = vmatpush1.bf16.msra.mxu0 %v852
    %943 = vmatprep.subr.bf16.mxu0 0
    %944 = vmatpush1.bf16.msra.mxu0 0
    %945 = vmatprep.subr.bf16.mxu0 0
    %946 = vmatpush1.bf16.msra.mxu0 0
    %947 = vmatprep.subr.bf16.mxu0 0
    %948 = vmatpush1.bf16.msra.mxu0 0
    %949 = vmatprep.subr.bf16.mxu0 0
    %950 = vmatpush1.bf16.msra.mxu0 0
    %951 = vmatprep.subr.bf16.mxu0 0
    %952 = vmatpush1.bf16.msra.mxu0 0
    %953 = vmatprep.subr.bf16.mxu0 0
    %954 = vmatpush1.bf16.msra.mxu0 0
    %955 = vmatprep.subr.bf16.mxu0 0
    %956 = vmatpush1.bf16.msra.mxu0 0
    %957 = vmatprep.subr.bf16.mxu0 0
    %958 = vmatpush1.bf16.msra.mxu0 0
    %959 = vmatprep.mubr.bf16.mxu0 0
    %960 = vmatmul.mubr.bf16.gmra.mrb[0].mxu0 0
    %v961 = vpop.f32.mrb[0].mxu0
    %v962 = vadd.f32 0.0, %v961
    %v963 = vpop.f32.mrb[0].mxu0
    %v964 = vadd.f32 0.0, %v963
    %v965 = vpop.f32.mrb[0].mxu0
    %v966 = vpop.f32.mrb[0].mxu0
    %967 = vdwg.mxu0
    %v968 = vadd.f32 %v722, %v921
    %v969 = vadd.f32 %v723, %v923
    %v970 = vadd.f32 %v724, %v962
    %v971 = vadd.f32 %v725, %v964
    %v972 = vxor.u32 %v968, 2147483648
    %v973 = vmul.f32 %v972, 1.442695
    %v974 = vpow.pop %v973
    %v975 = vadd.f32 %v974, 1.0
    %v976 = vrcp.pop %v975
    %v977 = vmul.f32 1.0, %v976
    %v978 = vxor.u32 %v969, 2147483648
    %v979 = vmul.f32 %v978, 1.442695
    %v980 = vpow.pop %v979
    %v981 = vadd.f32 %v980, 1.0
    %v982 = vrcp.pop %v981
    %v983 = vmul.f32 1.0, %v982
    %v984 = vtanh.pop %v970
    %v985 = vxor.u32 %v971, 2147483648
    %v986 = vmul.f32 %v985, 1.442695
    %v987 = vpow.pop %v986
    %v988 = vadd.f32 %v987, 1.0
    %v989 = vrcp.pop %v988
    %v990 = vmul.f32 1.0, %v989
    %v991 = vmul.f32 %v983, 0.0
    %v992 = vmul.f32 %v977, %v984
    %v993 = vadd.f32 %v991, %v992
    %v994 = vtanh.pop %v993
    %v995 = vmul.f32 %v990, %v994
    %v996 = vld [vmem:[#allocation2 + $0x20] sm:$0xff]
    %v997 = vld [vmem:[#allocation2 + $0x28] sm:$0xff]
    %v998 = vld [vmem:[#allocation2 + $0x30] sm:$0xff]
    %v999 = vld [vmem:[#allocation2 + $0x38] sm:$0xff]
    %v1000 = vpack.c.bf16 %v995, %v995
    %1001 = vmatprep.subr.bf16.mxu0 %v823
    %1002 = vmatpush1.bf16.msra.mxu0 %v822
    %1003 = vmatprep.subr.bf16.mxu0 %v827
    %1004 = vmatpush1.bf16.msra.mxu0 %v826
    %1005 = vmatprep.subr.bf16.mxu0 %v831
    %1006 = vmatpush1.bf16.msra.mxu0 %v830
    %1007 = vmatprep.subr.bf16.mxu0 %v835
    %1008 = vmatpush1.bf16.msra.mxu0 %v834
    %1009 = vmatprep.subr.bf16.mxu0 %v839
    %1010 = vmatpush1.bf16.msra.mxu0 %v838
    %1011 = vmatprep.subr.bf16.mxu0 %v843
    %1012 = vmatpush1.bf16.msra.mxu0 %v842
    %1013 = vmatprep.subr.bf16.mxu0 %v847
    %1014 = vmatpush1.bf16.msra.mxu0 %v846
    %1015 = vmatprep.subr.bf16.mxu0 %v851
    %1016 = vmatpush1.bf16.msra.mxu0 %v850
    %1017 = vmatprep.subr.bf16.mxu0 0
    %1018 = vmatpush1.bf16.msra.mxu0 0
    %1019 = vmatprep.subr.bf16.mxu0 0
    %1020 = vmatpush1.bf16.msra.mxu0 0
    %1021 = vmatprep.subr.bf16.mxu0 0
    %1022 = vmatpush1.bf16.msra.mxu0 0
    %1023 = vmatprep.subr.bf16.mxu0 0
    %1024 = vmatpush1.bf16.msra.mxu0 0
    %1025 = vmatprep.subr.bf16.mxu0 0
    %1026 = vmatpush1.bf16.msra.mxu0 0
    %1027 = vmatprep.subr.bf16.mxu0 0
    %1028 = vmatpush1.bf16.msra.mxu0 0
    %1029 = vmatprep.subr.bf16.mxu0 0
    %1030 = vmatpush1.bf16.msra.mxu0 0
    %1031 = vmatprep.subr.bf16.mxu0 0
    %1032 = vmatpush1.bf16.msra.mxu0 0
    %1033 = vmatprep.mubr.bf16.mxu0 0
    %1034 = vmatmul.mubr.bf16.gmra.mrb[0].mxu0 %v1000
    %v1035 = vpop.f32.mrb[0].mxu0
    %v1036 = vadd.f32 0.0, %v1035
    %v1037 = vpop.f32.mrb[0].mxu0
    %v1038 = vadd.f32 0.0, %v1037
    %v1039 = vpop.f32.mrb[0].mxu0
    %v1040 = vpop.f32.mrb[0].mxu0
    %1041 = vdwg.mxu0
    %1042 = vmatprep.subr.bf16.mxu0 %v825
    %1043 = vmatpush1.bf16.msra.mxu0 %v824
    %1044 = vmatprep.subr.bf16.mxu0 %v829
    %1045 = vmatpush1.bf16.msra.mxu0 %v828
    %1046 = vmatprep.subr.bf16.mxu0 %v833
    %1047 = vmatpush1.bf16.msra.mxu0 %v832
    %1048 = vmatprep.subr.bf16.mxu0 %v837
    %1049 = vmatpush1.bf16.msra.mxu0 %v836
    %1050 = vmatprep.subr.bf16.mxu0 %v841
    %1051 = vmatpush1.bf16.msra.mxu0 %v840
    %1052 = vmatprep.subr.bf16.mxu0 %v845
    %1053 = vmatpush1.bf16.msra.mxu0 %v844
    %1054 = vmatprep.subr.bf16.mxu0 %v849
    %1055 = vmatpush1.bf16.msra.mxu0 %v848
    %1056 = vmatprep.subr.bf16.mxu0 %v853
    %1057 = vmatpush1.bf16.msra.mxu0 %v852
    %1058 = vmatprep.subr.bf16.mxu0 0
    %1059 = vmatpush1.bf16.msra.mxu0 0
    %1060 = vmatprep.subr.bf16.mxu0 0
    %1061 = vmatpush1.bf16.msra.mxu0 0
    %1062 = vmatprep.subr.bf16.mxu0 0
    %1063 = vmatpush1.bf16.msra.mxu0 0
    %1064 = vmatprep.subr.bf16.mxu0 0
    %1065 = vmatpush1.bf16.msra.mxu0 0
    %1066 = vmatprep.subr.bf16.mxu0 0
    %1067 = vmatpush1.bf16.msra.mxu0 0
    %1068 = vmatprep.subr.bf16.mxu0 0
    %1069 = vmatpush1.bf16.msra.mxu0 0
    %1070 = vmatprep.subr.bf16.mxu0 0
    %1071 = vmatpush1.bf16.msra.mxu0 0
    %1072 = vmatprep.subr.bf16.mxu0 0
    %1073 = vmatpush1.bf16.msra.mxu0 0
    %1074 = vmatprep.mubr.bf16.mxu0 0
    %1075 = vmatmul.mubr.bf16.gmra.mrb[0].mxu0 %v1000
    %v1076 = vpop.f32.mrb[0].mxu0
    %v1077 = vadd.f32 0.0, %v1076
    %v1078 = vpop.f32.mrb[0].mxu0
    %v1079 = vadd.f32 0.0, %v1078
    %v1080 = vpop.f32.mrb[0].mxu0
    %v1081 = vpop.f32.mrb[0].mxu0
    %1082 = vdwg.mxu0
    %v1083 = vadd.f32 %v996, %v1036
    %v1084 = vadd.f32 %v997, %v1038
    %v1085 = vadd.f32 %v998, %v1077
    %v1086 = vadd.f32 %v999, %v1079
    %v1087 = vxor.u32 %v1083, 2147483648
    %v1088 = vmul.f32 %v1087, 1.442695
    %v1089 = vpow.pop %v1088
    %v1090 = vadd.f32 %v1089, 1.0
    %v1091 = vrcp.pop %v1090
    %v1092 = vmul.f32 1.0, %v1091
    %v1093 = vxor.u32 %v1084, 2147483648
    %v1094 = vmul.f32 %v1093, 1.442695
    %v1095 = vpow.pop %v1094
    %v1096 = vadd.f32 %v1095, 1.0
    %v1097 = vrcp.pop %v1096
    %v1098 = vmul.f32 1.0, %v1097
    %v1099 = vtanh.pop %v1085
    %v1100 = vxor.u32 %v1086, 2147483648
    %v1101 = vmul.f32 %v1100, 1.442695
    %v1102 = vpow.pop %v1101
    %v1103 = vadd.f32 %v1102, 1.0
    %v1104 = vrcp.pop %v1103
    %v1105 = vmul.f32 1.0, %v1104
    %v1106 = vmul.f32 %v1098, %v993
    %v1107 = vmul.f32 %v1092, %v1099
    %v1108 = vadd.f32 %v1106, %v1107
    %v1109 = vtanh.pop %v1108
    %v1110 = vmul.f32 %v1105, %v1109
    %v1111 = vld [vmem:[#allocation2 + $0x40] sm:$0xff]
    %v1112 = vld [vmem:[#allocation2 + $0x48] sm:$0xff]
    %v1113 = vld [vmem:[#allocation2 + $0x50] sm:$0xff]
    %v1114 = vld [vmem:[#allocation2 + $0x58] sm:$0xff]
    %v1115 = vpack.c.bf16 %v1110, %v1110
    %1116 = vmatprep.subr.bf16.mxu0 %v823
    %1117 = vmatpush1.bf16.msra.mxu0 %v822
    %1118 = vmatprep.subr.bf16.mxu0 %v827
    %1119 = vmatpush1.bf16.msra.mxu0 %v826
    %1120 = vmatprep.subr.bf16.mxu0 %v831
    %1121 = vmatpush1.bf16.msra.mxu0 %v830
    %1122 = vmatprep.subr.bf16.mxu0 %v835
    %1123 = vmatpush1.bf16.msra.mxu0 %v834
    %1124 = vmatprep.subr.bf16.mxu0 %v839
    %1125 = vmatpush1.bf16.msra.mxu0 %v838
    %1126 = vmatprep.subr.bf16.mxu0 %v843
    %1127 = vmatpush1.bf16.msra.mxu0 %v842
    %1128 = vmatprep.subr.bf16.mxu0 %v847
    %1129 = vmatpush1.bf16.msra.mxu0 %v846
    %1130 = vmatprep.subr.bf16.mxu0 %v851
    %1131 = vmatpush1.bf16.msra.mxu0 %v850
    %1132 = vmatprep.subr.bf16.mxu0 0
    %1133 = vmatpush1.bf16.msra.mxu0 0
    %1134 = vmatprep.subr.bf16.mxu0 0
    %1135 = vmatpush1.bf16.msra.mxu0 0
    %1136 = vmatprep.subr.bf16.mxu0 0
    %1137 = vmatpush1.bf16.msra.mxu0 0
    %1138 = vmatprep.subr.bf16.mxu0 0
    %1139 = vmatpush1.bf16.msra.mxu0 0
    %1140 = vmatprep.subr.bf16.mxu0 0
    %1141 = vmatpush1.bf16.msra.mxu0 0
    %1142 = vmatprep.subr.bf16.mxu0 0
    %1143 = vmatpush1.bf16.msra.mxu0 0
    %1144 = vmatprep.subr.bf16.mxu0 0
    %1145 = vmatpush1.bf16.msra.mxu0 0
    %1146 = vmatprep.subr.bf16.mxu0 0
    %1147 = vmatpush1.bf16.msra.mxu0 0
    %1148 = vmatprep.mubr.bf16.mxu0 0
    %1149 = vmatmul.mubr.bf16.gmra.mrb[0].mxu0 %v1115
    %v1150 = vpop.f32.mrb[0].mxu0
    %v1151 = vadd.f32 0.0, %v1150
    %v1152 = vpop.f32.mrb[0].mxu0
    %v1153 = vadd.f32 0.0, %v1152
    %v1154 = vpop.f32.mrb[0].mxu0
    %v1155 = vpop.f32.mrb[0].mxu0
    %1156 = vdwg.mxu0
    %1157 = vmatprep.subr.bf16.mxu0 %v825
    %1158 = vmatpush1.bf16.msra.mxu0 %v824
    %1159 = vmatprep.subr.bf16.mxu0 %v829
    %1160 = vmatpush1.bf16.msra.mxu0 %v828
    %1161 = vmatprep.subr.bf16.mxu0 %v833
    %1162 = vmatpush1.bf16.msra.mxu0 %v832
    %1163 = vmatprep.subr.bf16.mxu0 %v837
    %1164 = vmatpush1.bf16.msra.mxu0 %v836
    %1165 = vmatprep.subr.bf16.mxu0 %v841
    %1166 = vmatpush1.bf16.msra.mxu0 %v840
    %1167 = vmatprep.subr.bf16.mxu0 %v845
    %1168 = vmatpush1.bf16.msra.mxu0 %v844
    %1169 = vmatprep.subr.bf16.mxu0 %v849
    %1170 = vmatpush1.bf16.msra.mxu0 %v848
    %1171 = vmatprep.subr.bf16.mxu0 %v853
    %1172 = vmatpush1.bf16.msra.mxu0 %v852
    %1173 = vmatprep.subr.bf16.mxu0 0
    %1174 = vmatpush1.bf16.msra.mxu0 0
    %1175 = vmatprep.subr.bf16.mxu0 0
    %1176 = vmatpush1.bf16.msra.mxu0 0
    %1177 = vmatprep.subr.bf16.mxu0 0
    %1178 = vmatpush1.bf16.msra.mxu0 0
    %1179 = vmatprep.subr.bf16.mxu0 0
    %1180 = vmatpush1.bf16.msra.mxu0 0
    %1181 = vmatprep.subr.bf16.mxu0 0
    %1182 = vmatpush1.bf16.msra.mxu0 0
    %1183 = vmatprep.subr.bf16.mxu0 0
    %1184 = vmatpush1.bf16.msra.mxu0 0
    %1185 = vmatprep.subr.bf16.mxu0 0
    %1186 = vmatpush1.bf16.msra.mxu0 0
    %1187 = vmatprep.subr.bf16.mxu0 0
    %1188 = vmatpush1.bf16.msra.mxu0 0
    %1189 = vmatprep.mubr.bf16.mxu0 0
    %1190 = vmatmul.mubr.bf16.gmra.mrb[0].mxu0 %v1115
    %v1191 = vpop.f32.mrb[0].mxu0
    %v1192 = vadd.f32 0.0, %v1191
    %v1193 = vpop.f32.mrb[0].mxu0
    %v1194 = vadd.f32 0.0, %v1193
    %v1195 = vpop.f32.mrb[0].mxu0
    %v1196 = vpop.f32.mrb[0].mxu0
    %1197 = vdwg.mxu0
    %v1198 = vadd.f32 %v1111, %v1151
    %v1199 = vadd.f32 %v1112, %v1153
    %v1200 = vadd.f32 %v1113, %v1192
    %v1201 = vadd.f32 %v1114, %v1194
    %v1202 = vxor.u32 %v1198, 2147483648
    %v1203 = vmul.f32 %v1202, 1.442695
    %v1204 = vpow.pop %v1203
    %v1205 = vadd.f32 %v1204, 1.0
    %v1206 = vrcp.pop %v1205
    %v1207 = vmul.f32 1.0, %v1206
    %v1208 = vxor.u32 %v1199, 2147483648
    %v1209 = vmul.f32 %v1208, 1.442695
    %v1210 = vpow.pop %v1209
    %v1211 = vadd.f32 %v1210, 1.0
    %v1212 = vrcp.pop %v1211
    %v1213 = vmul.f32 1.0, %v1212
    %v1214 = vtanh.pop %v1200
    %v1215 = vxor.u32 %v1201, 2147483648
    %v1216 = vmul.f32 %v1215, 1.442695
    %v1217 = vpow.pop %v1216
    %v1218 = vadd.f32 %v1217, 1.0
    %v1219 = vrcp.pop %v1218
    %v1220 = vmul.f32 1.0, %v1219
    %v1221 = vmul.f32 %v1213, %v1108
    %v1222 = vmul.f32 %v1207, %v1214
    %v1223 = vadd.f32 %v1221, %v1222
    %v1224 = vtanh.pop %v1223
    %v1225 = vmul.f32 %v1220, %v1224
    %v1226 = vld [vmem:[#allocation2 + $0x60] sm:$0xff]
    %v1227 = vld [vmem:[#allocation2 + $0x68] sm:$0xff]
    %v1228 = vld [vmem:[#allocation2 + $0x70] sm:$0xff]
    %v1229 = vld [vmem:[#allocation2 + $0x78] sm:$0xff]
    %v1230 = vpack.c.bf16 %v1225, %v1225
    %1231 = vmatprep.subr.bf16.mxu0 %v823
    %1232 = vmatpush1.bf16.msra.mxu0 %v822
    %1233 = vmatprep.subr.bf16.mxu0 %v827
    %1234 = vmatpush1.bf16.msra.mxu0 %v826
    %1235 = vmatprep.subr.bf16.mxu0 %v831
    %1236 = vmatpush1.bf16.msra.mxu0 %v830
    %1237 = vmatprep.subr.bf16.mxu0 %v835
    %1238 = vmatpush1.bf16.msra.mxu0 %v834
    %1239 = vmatprep.subr.bf16.mxu0 %v839
    %1240 = vmatpush1.bf16.msra.mxu0 %v838
    %1241 = vmatprep.subr.bf16.mxu0 %v843
    %1242 = vmatpush1.bf16.msra.mxu0 %v842
    %1243 = vmatprep.subr.bf16.mxu0 %v847
    %1244 = vmatpush1.bf16.msra.mxu0 %v846
    %1245 = vmatprep.subr.bf16.mxu0 %v851
    %1246 = vmatpush1.bf16.msra.mxu0 %v850
    %1247 = vmatprep.subr.bf16.mxu0 0
    %1248 = vmatpush1.bf16.msra.mxu0 0
    %1249 = vmatprep.subr.bf16.mxu0 0
    %1250 = vmatpush1.bf16.msra.mxu0 0
    %1251 = vmatprep.subr.bf16.mxu0 0
    %1252 = vmatpush1.bf16.msra.mxu0 0
    %1253 = vmatprep.subr.bf16.mxu0 0
    %1254 = vmatpush1.bf16.msra.mxu0 0
    %1255 = vmatprep.subr.bf16.mxu0 0
    %1256 = vmatpush1.bf16.msra.mxu0 0
    %1257 = vmatprep.subr.bf16.mxu0 0
    %1258 = vmatpush1.bf16.msra.mxu0 0
    %1259 = vmatprep.subr.bf16.mxu0 0
    %1260 = vmatpush1.bf16.msra.mxu0 0
    %1261 = vmatprep.subr.bf16.mxu0 0
    %1262 = vmatpush1.bf16.msra.mxu0 0
    %1263 = vmatprep.mubr.bf16.mxu0 0
    %1264 = vmatmul.mubr.bf16.gmra.mrb[0].mxu0 %v1230
    %v1265 = vpop.f32.mrb[0].mxu0
    %v1266 = vadd.f32 0.0, %v1265
    %v1267 = vpop.f32.mrb[0].mxu0
    %v1268 = vadd.f32 0.0, %v1267
    %v1269 = vpop.f32.mrb[0].mxu0
    %v1270 = vpop.f32.mrb[0].mxu0
    %1271 = vdwg.mxu0
    %1272 = vmatprep.subr.bf16.mxu0 %v825
    %1273 = vmatpush1.bf16.msra.mxu0 %v824
    %1274 = vmatprep.subr.bf16.mxu0 %v829
    %1275 = vmatpush1.bf16.msra.mxu0 %v828
    %1276 = vmatprep.subr.bf16.mxu0 %v833
    %1277 = vmatpush1.bf16.msra.mxu0 %v832
    %1278 = vmatprep.subr.bf16.mxu0 %v837
    %1279 = vmatpush1.bf16.msra.mxu0 %v836
    %1280 = vmatprep.subr.bf16.mxu0 %v841
    %1281 = vmatpush1.bf16.msra.mxu0 %v840
    %1282 = vmatprep.subr.bf16.mxu0 %v845
    %1283 = vmatpush1.bf16.msra.mxu0 %v844
    %1284 = vmatprep.subr.bf16.mxu0 %v849
    %1285 = vmatpush1.bf16.msra.mxu0 %v848
    %1286 = vmatprep.subr.bf16.mxu0 %v853
    %1287 = vmatpush1.bf16.msra.mxu0 %v852
    %1288 = vmatprep.subr.bf16.mxu0 0
    %1289 = vmatpush1.bf16.msra.mxu0 0
    %1290 = vmatprep.subr.bf16.mxu0 0
    %1291 = vmatpush1.bf16.msra.mxu0 0
    %1292 = vmatprep.subr.bf16.mxu0 0
    %1293 = vmatpush1.bf16.msra.mxu0 0
    %1294 = vmatprep.subr.bf16.mxu0 0
    %1295 = vmatpush1.bf16.msra.mxu0 0
    %1296 = vmatprep.subr.bf16.mxu0 0
    %1297 = vmatpush1.bf16.msra.mxu0 0
    %1298 = vmatprep.subr.bf16.mxu0 0
    %1299 = vmatpush1.bf16.msra.mxu0 0
    %1300 = vmatprep.subr.bf16.mxu0 0
    %1301 = vmatpush1.bf16.msra.mxu0 0
    %1302 = vmatprep.subr.bf16.mxu0 0
    %1303 = vmatpush1.bf16.msra.mxu0 0
    %1304 = vmatprep.mubr.bf16.mxu0 0
    %1305 = vmatmul.mubr.bf16.gmra.mrb[0].mxu0 %v1230
    %v1306 = vpop.f32.mrb[0].mxu0
    %v1307 = vadd.f32 0.0, %v1306
    %v1308 = vpop.f32.mrb[0].mxu0
    %v1309 = vadd.f32 0.0, %v1308
    %v1310 = vpop.f32.mrb[0].mxu0
    %v1311 = vpop.f32.mrb[0].mxu0
    %1312 = vdwg.mxu0
    %v1313 = vadd.f32 %v1226, %v1266
    %v1314 = vadd.f32 %v1227, %v1268
    %v1315 = vadd.f32 %v1228, %v1307
    %v1316 = vadd.f32 %v1229, %v1309
    %v1317 = vxor.u32 %v1313, 2147483648
    %v1318 = vmul.f32 %v1317, 1.442695
    %v1319 = vpow.pop %v1318
    %v1320 = vadd.f32 %v1319, 1.0
    %v1321 = vrcp.pop %v1320
    %v1322 = vmul.f32 1.0, %v1321
    %v1323 = vxor.u32 %v1314, 2147483648
    %v1324 = vmul.f32 %v1323, 1.442695
    %v1325 = vpow.pop %v1324
    %v1326 = vadd.f32 %v1325, 1.0
    %v1327 = vrcp.pop %v1326
    %v1328 = vmul.f32 1.0, %v1327
    %v1329 = vtanh.pop %v1315
    %v1330 = vxor.u32 %v1316, 2147483648
    %v1331 = vmul.f32 %v1330, 1.442695
    %v1332 = vpow.pop %v1331
    %v1333 = vadd.f32 %v1332, 1.0
    %v1334 = vrcp.pop %v1333
    %v1335 = vmul.f32 1.0, %v1334
    %v1336 = vmul.f32 %v1328, %v1223
    %v1337 = vmul.f32 %v1322, %v1329
    %v1338 = vadd.f32 %v1336, %v1337
    %v1339 = vtanh.pop %v1338
    %v1340 = vmul.f32 %v1335, %v1339
    %v1341 = vld [vmem:[#allocation2 + $0x80] sm:$0xff]
    %v1342 = vld [vmem:[#allocation2 + $0x88] sm:$0xff]
    %v1343 = vld [vmem:[#allocation2 + $0x90] sm:$0xff]
    %v1344 = vld [vmem:[#allocation2 + $0x98] sm:$0xff]
    %v1345 = vpack.c.bf16 %v1340, %v1340
    %1346 = vmatprep.subr.bf16.mxu0 %v823
    %1347 = vmatpush1.bf16.msra.mxu0 %v822
    %1348 = vmatprep.subr.bf16.mxu0 %v827
    %1349 = vmatpush1.bf16.msra.mxu0 %v826
    %1350 = vmatprep.subr.bf16.mxu0 %v831
    %1351 = vmatpush1.bf16.msra.mxu0 %v830
    %1352 = vmatprep.subr.bf16.mxu0 %v835
    %1353 = vmatpush1.bf16.msra.mxu0 %v834
    %1354 = vmatprep.subr.bf16.mxu0 %v839
    %1355 = vmatpush1.bf16.msra.mxu0 %v838
    %1356 = vmatprep.subr.bf16.mxu0 %v843
    %1357 = vmatpush1.bf16.msra.mxu0 %v842
    %1358 = vmatprep.subr.bf16.mxu0 %v847
    %1359 = vmatpush1.bf16.msra.mxu0 %v846
    %1360 = vmatprep.subr.bf16.mxu0 %v851
    %1361 = vmatpush1.bf16.msra.mxu0 %v850
    %1362 = vmatprep.subr.bf16.mxu0 0
    %1363 = vmatpush1.bf16.msra.mxu0 0
    %1364 = vmatprep.subr.bf16.mxu0 0
    %1365 = vmatpush1.bf16.msra.mxu0 0
    %1366 = vmatprep.subr.bf16.mxu0 0
    %1367 = vmatpush1.bf16.msra.mxu0 0
    %1368 = vmatprep.subr.bf16.mxu0 0
    %1369 = vmatpush1.bf16.msra.mxu0 0
    %1370 = vmatprep.subr.bf16.mxu0 0
    %1371 = vmatpush1.bf16.msra.mxu0 0
    %1372 = vmatprep.subr.bf16.mxu0 0
    %1373 = vmatpush1.bf16.msra.mxu0 0
    %1374 = vmatprep.subr.bf16.mxu0 0
    %1375 = vmatpush1.bf16.msra.mxu0 0
    %1376 = vmatprep.subr.bf16.mxu0 0
    %1377 = vmatpush1.bf16.msra.mxu0 0
    %1378 = vmatprep.mubr.bf16.mxu0 0
    %1379 = vmatmul.mubr.bf16.gmra.mrb[0].mxu0 %v1345
    %v1380 = vpop.f32.mrb[0].mxu0
    %v1381 = vadd.f32 0.0, %v1380
    %v1382 = vpop.f32.mrb[0].mxu0
    %v1383 = vadd.f32 0.0, %v1382
    %v1384 = vpop.f32.mrb[0].mxu0
    %v1385 = vpop.f32.mrb[0].mxu0
    %1386 = vdwg.mxu0
    %1387 = vmatprep.subr.bf16.mxu0 %v825
    %1388 = vmatpush1.bf16.msra.mxu0 %v824
    %1389 = vmatprep.subr.bf16.mxu0 %v829
    %1390 = vmatpush1.bf16.msra.mxu0 %v828
    %1391 = vmatprep.subr.bf16.mxu0 %v833
    %1392 = vmatpush1.bf16.msra.mxu0 %v832
    %1393 = vmatprep.subr.bf16.mxu0 %v837
    %1394 = vmatpush1.bf16.msra.mxu0 %v836
    %1395 = vmatprep.subr.bf16.mxu0 %v841
    %1396 = vmatpush1.bf16.msra.mxu0 %v840
    %1397 = vmatprep.subr.bf16.mxu0 %v845
    %1398 = vmatpush1.bf16.msra.mxu0 %v844
    %1399 = vmatprep.subr.bf16.mxu0 %v849
    %1400 = vmatpush1.bf16.msra.mxu0 %v848
    %1401 = vmatprep.subr.bf16.mxu0 %v853
    %1402 = vmatpush1.bf16.msra.mxu0 %v852
    %1403 = vmatprep.subr.bf16.mxu0 0
    %1404 = vmatpush1.bf16.msra.mxu0 0
    %1405 = vmatprep.subr.bf16.mxu0 0
    %1406 = vmatpush1.bf16.msra.mxu0 0
    %1407 = vmatprep.subr.bf16.mxu0 0
    %1408 = vmatpush1.bf16.msra.mxu0 0
    %1409 = vmatprep.subr.bf16.mxu0 0
    %1410 = vmatpush1.bf16.msra.mxu0 0
    %1411 = vmatprep.subr.bf16.mxu0 0
    %1412 = vmatpush1.bf16.msra.mxu0 0
    %1413 = vmatprep.subr.bf16.mxu0 0
    %1414 = vmatpush1.bf16.msra.mxu0 0
    %1415 = vmatprep.subr.bf16.mxu0 0
    %1416 = vmatpush1.bf16.msra.mxu0 0
    %1417 = vmatprep.subr.bf16.mxu0 0
    %1418 = vmatpush1.bf16.msra.mxu0 0
    %1419 = vmatprep.mubr.bf16.mxu0 0
    %1420 = vmatmul.mubr.bf16.gmra.mrb[0].mxu0 %v1345
    %v1421 = vpop.f32.mrb[0].mxu0
    %v1422 = vadd.f32 0.0, %v1421
    %v1423 = vpop.f32.mrb[0].mxu0
    %v1424 = vadd.f32 0.0, %v1423
    %v1425 = vpop.f32.mrb[0].mxu0
    %v1426 = vpop.f32.mrb[0].mxu0
    %1427 = vdwg.mxu0
    %v1428 = vadd.f32 %v1341, %v1381
    %v1429 = vadd.f32 %v1342, %v1383
    %v1430 = vadd.f32 %v1343, %v1422
    %v1431 = vadd.f32 %v1344, %v1424
    %v1432 = vxor.u32 %v1428, 2147483648
    %v1433 = vmul.f32 %v1432, 1.442695
    %v1434 = vpow.pop %v1433
    %v1435 = vadd.f32 %v1434, 1.0
    %v1436 = vrcp.pop %v1435
    %v1437 = vmul.f32 1.0, %v1436
    %v1438 = vxor.u32 %v1429, 2147483648
    %v1439 = vmul.f32 %v1438, 1.442695
    %v1440 = vpow.pop %v1439
    %v1441 = vadd.f32 %v1440, 1.0
    %v1442 = vrcp.pop %v1441
    %v1443 = vmul.f32 1.0, %v1442
    %v1444 = vtanh.pop %v1430
    %v1445 = vxor.u32 %v1431, 2147483648
    %v1446 = vmul.f32 %v1445, 1.442695
    %v1447 = vpow.pop %v1446
    %v1448 = vadd.f32 %v1447, 1.0
    %v1449 = vrcp.pop %v1448
    %v1450 = vmul.f32 1.0, %v1449
    %v1451 = vmul.f32 %v1443, %v1338
    %v1452 = vmul.f32 %v1437, %v1444
    %v1453 = vadd.f32 %v1451, %v1452
    %v1454 = vtanh.pop %v1453
    %v1455 = vmul.f32 %v1450, %v1454
    %v1456 = vld [vmem:[#allocation2 + $0xa0] sm:$0xff]
    %v1457 = vld [vmem:[#allocation2 + $0xa8] sm:$0xff]
    %v1458 = vld [vmem:[#allocation2 + $0xb0] sm:$0xff]
    %v1459 = vld [vmem:[#allocation2 + $0xb8] sm:$0xff]
    %v1460 = vpack.c.bf16 %v1455, %v1455
    %1461 = vmatprep.subr.bf16.mxu0 %v823
    %1462 = vmatpush1.bf16.msra.mxu0 %v822
    %1463 = vmatprep.subr.bf16.mxu0 %v827
    %1464 = vmatpush1.bf16.msra.mxu0 %v826
    %1465 = vmatprep.subr.bf16.mxu0 %v831
    %1466 = vmatpush1.bf16.msra.mxu0 %v830
    %1467 = vmatprep.subr.bf16.mxu0 %v835
    %1468 = vmatpush1.bf16.msra.mxu0 %v834
    %1469 = vmatprep.subr.bf16.mxu0 %v839
    %1470 = vmatpush1.bf16.msra.mxu0 %v838
    %1471 = vmatprep.subr.bf16.mxu0 %v843
    %1472 = vmatpush1.bf16.msra.mxu0 %v842
    %1473 = vmatprep.subr.bf16.mxu0 %v847
    %1474 = vmatpush1.bf16.msra.mxu0 %v846
    %1475 = vmatprep.subr.bf16.mxu0 %v851
    %1476 = vmatpush1.bf16.msra.mxu0 %v850
    %1477 = vmatprep.subr.bf16.mxu0 0
    %1478 = vmatpush1.bf16.msra.mxu0 0
    %1479 = vmatprep.subr.bf16.mxu0 0
    %1480 = vmatpush1.bf16.msra.mxu0 0
    %1481 = vmatprep.subr.bf16.mxu0 0
    %1482 = vmatpush1.bf16.msra.mxu0 0
    %1483 = vmatprep.subr.bf16.mxu0 0
    %1484 = vmatpush1.bf16.msra.mxu0 0
    %1485 = vmatprep.subr.bf16.mxu0 0
    %1486 = vmatpush1.bf16.msra.mxu0 0
    %1487 = vmatprep.subr.bf16.mxu0 0
    %1488 = vmatpush1.bf16.msra.mxu0 0
    %1489 = vmatprep.subr.bf16.mxu0 0
    %1490 = vmatpush1.bf16.msra.mxu0 0
    %1491 = vmatprep.subr.bf16.mxu0 0
    %1492 = vmatpush1.bf16.msra.mxu0 0
    %1493 = vmatprep.mubr.bf16.mxu0 0
    %1494 = vmatmul.mubr.bf16.gmra.mrb[0].mxu0 %v1460
    %v1495 = vpop.f32.mrb[0].mxu0
    %v1496 = vadd.f32 0.0, %v1495
    %v1497 = vpop.f32.mrb[0].mxu0
    %v1498 = vadd.f32 0.0, %v1497
    %v1499 = vpop.f32.mrb[0].mxu0
    %v1500 = vpop.f32.mrb[0].mxu0
    %1501 = vdwg.mxu0
    %1502 = vmatprep.subr.bf16.mxu0 %v825
    %1503 = vmatpush1.bf16.msra.mxu0 %v824
    %1504 = vmatprep.subr.bf16.mxu0 %v829
    %1505 = vmatpush1.bf16.msra.mxu0 %v828
    %1506 = vmatprep.subr.bf16.mxu0 %v833
    %1507 = vmatpush1.bf16.msra.mxu0 %v832
    %1508 = vmatprep.subr.bf16.mxu0 %v837
    %1509 = vmatpush1.bf16.msra.mxu0 %v836
    %1510 = vmatprep.subr.bf16.mxu0 %v841
    %1511 = vmatpush1.bf16.msra.mxu0 %v840
    %1512 = vmatprep.subr.bf16.mxu0 %v845
    %1513 = vmatpush1.bf16.msra.mxu0 %v844
    %1514 = vmatprep.subr.bf16.mxu0 %v849
    %1515 = vmatpush1.bf16.msra.mxu0 %v848
    %1516 = vmatprep.subr.bf16.mxu0 %v853
    %1517 = vmatpush1.bf16.msra.mxu0 %v852
    %1518 = vmatprep.subr.bf16.mxu0 0
    %1519 = vmatpush1.bf16.msra.mxu0 0
    %1520 = vmatprep.subr.bf16.mxu0 0
    %1521 = vmatpush1.bf16.msra.mxu0 0
    %1522 = vmatprep.subr.bf16.mxu0 0
    %1523 = vmatpush1.bf16.msra.mxu0 0
    %1524 = vmatprep.subr.bf16.mxu0 0
    %1525 = vmatpush1.bf16.msra.mxu0 0
    %1526 = vmatprep.subr.bf16.mxu0 0
    %1527 = vmatpush1.bf16.msra.mxu0 0
    %1528 = vmatprep.subr.bf16.mxu0 0
    %1529 = vmatpush1.bf16.msra.mxu0 0
    %1530 = vmatprep.subr.bf16.mxu0 0
    %1531 = vmatpush1.bf16.msra.mxu0 0
    %1532 = vmatprep.subr.bf16.mxu0 0
    %1533 = vmatpush1.bf16.msra.mxu0 0
    %1534 = vmatprep.mubr.bf16.mxu0 0
    %1535 = vmatmul.mubr.bf16.gmra.mrb[0].mxu0 %v1460
    %v1536 = vpop.f32.mrb[0].mxu0
    %v1537 = vadd.f32 0.0, %v1536
    %v1538 = vpop.f32.mrb[0].mxu0
    %v1539 = vadd.f32 0.0, %v1538
    %v1540 = vpop.f32.mrb[0].mxu0
    %v1541 = vpop.f32.mrb[0].mxu0
    %1542 = vdwg.mxu0
    %v1543 = vadd.f32 %v1456, %v1496
    %v1544 = vadd.f32 %v1457, %v1498
    %v1545 = vadd.f32 %v1458, %v1537
    %v1546 = vadd.f32 %v1459, %v1539
    %v1547 = vxor.u32 %v1543, 2147483648
    %v1548 = vmul.f32 %v1547, 1.442695
    %v1549 = vpow.pop %v1548
    %v1550 = vadd.f32 %v1549, 1.0
    %v1551 = vrcp.pop %v1550
    %v1552 = vmul.f32 1.0, %v1551
    %v1553 = vxor.u32 %v1544, 2147483648
    %v1554 = vmul.f32 %v1553, 1.442695
    %v1555 = vpow.pop %v1554
    %v1556 = vadd.f32 %v1555, 1.0
    %v1557 = vrcp.pop %v1556
    %v1558 = vmul.f32 1.0, %v1557
    %v1559 = vtanh.pop %v1545
    %v1560 = vxor.u32 %v1546, 2147483648
    %v1561 = vmul.f32 %v1560, 1.442695
    %v1562 = vpow.pop %v1561
    %v1563 = vadd.f32 %v1562, 1.0
    %v1564 = vrcp.pop %v1563
    %v1565 = vmul.f32 1.0, %v1564
    %v1566 = vmul.f32 %v1558, %v1453
    %v1567 = vmul.f32 %v1552, %v1559
    %v1568 = vadd.f32 %v1566, %v1567
    %v1569 = vtanh.pop %v1568
    %v1570 = vmul.f32 %v1565, %v1569
    %v1571 = vld [vmem:[#allocation2 + $0xc0] sm:$0xff]
    %v1572 = vld [vmem:[#allocation2 + $0xc8] sm:$0xff]
    %v1573 = vld [vmem:[#allocation2 + $0xd0] sm:$0xff]
    %v1574 = vld [vmem:[#allocation2 + $0xd8] sm:$0xff]
    %v1575 = vpack.c.bf16 %v1570, %v1570
    %1576 = vmatprep.subr.bf16.mxu0 %v823
    %1577 = vmatpush1.bf16.msra.mxu0 %v822
    %1578 = vmatprep.subr.bf16.mxu0 %v827
    %1579 = vmatpush1.bf16.msra.mxu0 %v826
    %1580 = vmatprep.subr.bf16.mxu0 %v831
    %1581 = vmatpush1.bf16.msra.mxu0 %v830
    %1582 = vmatprep.subr.bf16.mxu0 %v835
    %1583 = vmatpush1.bf16.msra.mxu0 %v834
    %1584 = vmatprep.subr.bf16.mxu0 %v839
    %1585 = vmatpush1.bf16.msra.mxu0 %v838
    %1586 = vmatprep.subr.bf16.mxu0 %v843
    %1587 = vmatpush1.bf16.msra.mxu0 %v842
    %1588 = vmatprep.subr.bf16.mxu0 %v847
    %1589 = vmatpush1.bf16.msra.mxu0 %v846
    %1590 = vmatprep.subr.bf16.mxu0 %v851
    %1591 = vmatpush1.bf16.msra.mxu0 %v850
    %1592 = vmatprep.subr.bf16.mxu0 0
    %1593 = vmatpush1.bf16.msra.mxu0 0
    %1594 = vmatprep.subr.bf16.mxu0 0
    %1595 = vmatpush1.bf16.msra.mxu0 0
    %1596 = vmatprep.subr.bf16.mxu0 0
    %1597 = vmatpush1.bf16.msra.mxu0 0
    %1598 = vmatprep.subr.bf16.mxu0 0
    %1599 = vmatpush1.bf16.msra.mxu0 0
    %1600 = vmatprep.subr.bf16.mxu0 0
    %1601 = vmatpush1.bf16.msra.mxu0 0
    %1602 = vmatprep.subr.bf16.mxu0 0
    %1603 = vmatpush1.bf16.msra.mxu0 0
    %1604 = vmatprep.subr.bf16.mxu0 0
    %1605 = vmatpush1.bf16.msra.mxu0 0
    %1606 = vmatprep.subr.bf16.mxu0 0
    %1607 = vmatpush1.bf16.msra.mxu0 0
    %1608 = vmatprep.mubr.bf16.mxu0 0
    %1609 = vmatmul.mubr.bf16.gmra.mrb[0].mxu0 %v1575
    %v1610 = vpop.f32.mrb[0].mxu0
    %v1611 = vadd.f32 0.0, %v1610
    %v1612 = vpop.f32.mrb[0].mxu0
    %v1613 = vadd.f32 0.0, %v1612
    %v1614 = vpop.f32.mrb[0].mxu0
    %v1615 = vpop.f32.mrb[0].mxu0
    %1616 = vdwg.mxu0
    %1617 = vmatprep.subr.bf16.mxu0 %v825
    %1618 = vmatpush1.bf16.msra.mxu0 %v824
    %1619 = vmatprep.subr.bf16.mxu0 %v829
    %1620 = vmatpush1.bf16.msra.mxu0 %v828
    %1621 = vmatprep.subr.bf16.mxu0 %v833
    %1622 = vmatpush1.bf16.msra.mxu0 %v832
    %1623 = vmatprep.subr.bf16.mxu0 %v837
    %1624 = vmatpush1.bf16.msra.mxu0 %v836
    %1625 = vmatprep.subr.bf16.mxu0 %v841
    %1626 = vmatpush1.bf16.msra.mxu0 %v840
    %1627 = vmatprep.subr.bf16.mxu0 %v845
    %1628 = vmatpush1.bf16.msra.mxu0 %v844
    %1629 = vmatprep.subr.bf16.mxu0 %v849
    %1630 = vmatpush1.bf16.msra.mxu0 %v848
    %1631 = vmatprep.subr.bf16.mxu0 %v853
    %1632 = vmatpush1.bf16.msra.mxu0 %v852
    %1633 = vmatprep.subr.bf16.mxu0 0
    %1634 = vmatpush1.bf16.msra.mxu0 0
    %1635 = vmatprep.subr.bf16.mxu0 0
    %1636 = vmatpush1.bf16.msra.mxu0 0
    %1637 = vmatprep.subr.bf16.mxu0 0
    %1638 = vmatpush1.bf16.msra.mxu0 0
    %1639 = vmatprep.subr.bf16.mxu0 0
    %1640 = vmatpush1.bf16.msra.mxu0 0
    %1641 = vmatprep.subr.bf16.mxu0 0
    %1642 = vmatpush1.bf16.msra.mxu0 0
    %1643 = vmatprep.subr.bf16.mxu0 0
    %1644 = vmatpush1.bf16.msra.mxu0 0
    %1645 = vmatprep.subr.bf16.mxu0 0
    %1646 = vmatpush1.bf16.msra.mxu0 0
    %1647 = vmatprep.subr.bf16.mxu0 0
    %1648 = vmatpush1.bf16.msra.mxu0 0
    %1649 = vmatprep.mubr.bf16.mxu0 0
    %1650 = vmatmul.mubr.bf16.gmra.mrb[0].mxu0 %v1575
    %v1651 = vpop.f32.mrb[0].mxu0
    %v1652 = vadd.f32 0.0, %v1651
    %v1653 = vpop.f32.mrb[0].mxu0
    %v1654 = vadd.f32 0.0, %v1653
    %v1655 = vpop.f32.mrb[0].mxu0
    %v1656 = vpop.f32.mrb[0].mxu0
    %1657 = vdwg.mxu0
    %v1658 = vadd.f32 %v1571, %v1611
    %v1659 = vadd.f32 %v1572, %v1613
    %v1660 = vadd.f32 %v1573, %v1652
    %v1661 = vadd.f32 %v1574, %v1654
    %v1662 = vxor.u32 %v1658, 2147483648
    %v1663 = vmul.f32 %v1662, 1.442695
    %v1664 = vpow.pop %v1663
    %v1665 = vadd.f32 %v1664, 1.0
    %v1666 = vrcp.pop %v1665
    %v1667 = vmul.f32 1.0, %v1666
    %v1668 = vxor.u32 %v1659, 2147483648
    %v1669 = vmul.f32 %v1668, 1.442695
    %v1670 = vpow.pop %v1669
    %v1671 = vadd.f32 %v1670, 1.0
    %v1672 = vrcp.pop %v1671
    %v1673 = vmul.f32 1.0, %v1672
    %v1674 = vtanh.pop %v1660
    %v1675 = vxor.u32 %v1661, 2147483648
    %v1676 = vmul.f32 %v1675, 1.442695
    %v1677 = vpow.pop %v1676
    %v1678 = vadd.f32 %v1677, 1.0
    %v1679 = vrcp.pop %v1678
    %v1680 = vmul.f32 1.0, %v1679
    %v1681 = vmul.f32 %v1673, %v1568
    %v1682 = vmul.f32 %v1667, %v1674
    %v1683 = vadd.f32 %v1681, %v1682
    %v1684 = vtanh.pop %v1683
    %v1685 = vmul.f32 %v1680, %v1684
    %v1686 = vld [vmem:[#allocation2 + $0xe0] sm:$0xff]
    %v1687 = vld [vmem:[#allocation2 + $0xe8] sm:$0xff]
    %v1688 = vld [vmem:[#allocation2 + $0xf0] sm:$0xff]
    %v1689 = vld [vmem:[#allocation2 + $0xf8] sm:$0xff]
    %v1690 = vpack.c.bf16 %v1685, %v1685
    %1691 = vmatprep.subr.bf16.mxu0 %v823
    %1692 = vmatpush1.bf16.msra.mxu0 %v822
    %1693 = vmatprep.subr.bf16.mxu0 %v827
    %1694 = vmatpush1.bf16.msra.mxu0 %v826
    %1695 = vmatprep.subr.bf16.mxu0 %v831
    %1696 = vmatpush1.bf16.msra.mxu0 %v830
    %1697 = vmatprep.subr.bf16.mxu0 %v835
    %1698 = vmatpush1.bf16.msra.mxu0 %v834
    %1699 = vmatprep.subr.bf16.mxu0 %v839
    %1700 = vmatpush1.bf16.msra.mxu0 %v838
    %1701 = vmatprep.subr.bf16.mxu0 %v843
    %1702 = vmatpush1.bf16.msra.mxu0 %v842
    %1703 = vmatprep.subr.bf16.mxu0 %v847
    %1704 = vmatpush1.bf16.msra.mxu0 %v846
    %1705 = vmatprep.subr.bf16.mxu0 %v851
    %1706 = vmatpush1.bf16.msra.mxu0 %v850
    %1707 = vmatprep.subr.bf16.mxu0 0
    %1708 = vmatpush1.bf16.msra.mxu0 0
    %1709 = vmatprep.subr.bf16.mxu0 0
    %1710 = vmatpush1.bf16.msra.mxu0 0
    %1711 = vmatprep.subr.bf16.mxu0 0
    %1712 = vmatpush1.bf16.msra.mxu0 0
    %1713 = vmatprep.subr.bf16.mxu0 0
    %1714 = vmatpush1.bf16.msra.mxu0 0
    %1715 = vmatprep.subr.bf16.mxu0 0
    %1716 = vmatpush1.bf16.msra.mxu0 0
    %1717 = vmatprep.subr.bf16.mxu0 0
    %1718 = vmatpush1.bf16.msra.mxu0 0
    %1719 = vmatprep.subr.bf16.mxu0 0
    %1720 = vmatpush1.bf16.msra.mxu0 0
    %1721 = vmatprep.subr.bf16.mxu0 0
    %1722 = vmatpush1.bf16.msra.mxu0 0
    %1723 = vmatprep.mubr.bf16.mxu0 0
    %1724 = vmatmul.mubr.bf16.gmra.mrb[0].mxu0 %v1690
    %v1725 = vpop.f32.mrb[0].mxu0
    %v1726 = vadd.f32 0.0, %v1725
    %v1727 = vpop.f32.mrb[0].mxu0
    %v1728 = vadd.f32 0.0, %v1727
    %v1729 = vpop.f32.mrb[0].mxu0
    %v1730 = vpop.f32.mrb[0].mxu0
    %1731 = vdwg.mxu0
    %1732 = vmatprep.subr.bf16.mxu0 %v825
    %1733 = vmatpush1.bf16.msra.mxu0 %v824
    %1734 = vmatprep.subr.bf16.mxu0 %v829
    %1735 = vmatpush1.bf16.msra.mxu0 %v828
    %1736 = vmatprep.subr.bf16.mxu0 %v833
    %1737 = vmatpush1.bf16.msra.mxu0 %v832
    %1738 = vmatprep.subr.bf16.mxu0 %v837
    %1739 = vmatpush1.bf16.msra.mxu0 %v836
    %1740 = vmatprep.subr.bf16.mxu0 %v841
    %1741 = vmatpush1.bf16.msra.mxu0 %v840
    %1742 = vmatprep.subr.bf16.mxu0 %v845
    %1743 = vmatpush1.bf16.msra.mxu0 %v844
    %1744 = vmatprep.subr.bf16.mxu0 %v849
    %1745 = vmatpush1.bf16.msra.mxu0 %v848
    %1746 = vmatprep.subr.bf16.mxu0 %v853
    %1747 = vmatpush1.bf16.msra.mxu0 %v852
    %1748 = vmatprep.subr.bf16.mxu0 0
    %1749 = vmatpush1.bf16.msra.mxu0 0
    %1750 = vmatprep.subr.bf16.mxu0 0
    %1751 = vmatpush1.bf16.msra.mxu0 0
    %1752 = vmatprep.subr.bf16.mxu0 0
    %1753 = vmatpush1.bf16.msra.mxu0 0
    %1754 = vmatprep.subr.bf16.mxu0 0
    %1755 = vmatpush1.bf16.msra.mxu0 0
    %1756 = vmatprep.subr.bf16.mxu0 0
    %1757 = vmatpush1.bf16.msra.mxu0 0
    %1758 = vmatprep.subr.bf16.mxu0 0
    %1759 = vmatpush1.bf16.msra.mxu0 0
    %1760 = vmatprep.subr.bf16.mxu0 0
    %1761 = vmatpush1.bf16.msra.mxu0 0
    %1762 = vmatprep.subr.bf16.mxu0 0
    %1763 = vmatpush1.bf16.msra.mxu0 0
    %1764 = vmatprep.mubr.bf16.mxu0 0
    %1765 = vmatmul.mubr.bf16.gmra.mrb[0].mxu0 %v1690
    %v1766 = vpop.f32.mrb[0].mxu0
    %v1767 = vadd.f32 0.0, %v1766
    %v1768 = vpop.f32.mrb[0].mxu0
    %v1769 = vadd.f32 0.0, %v1768
    %v1770 = vpop.f32.mrb[0].mxu0
    %v1771 = vpop.f32.mrb[0].mxu0
    %1772 = vdwg.mxu0
    %v1773 = vadd.f32 %v1686, %v1726
    %v1774 = vadd.f32 %v1687, %v1728
    %v1775 = vadd.f32 %v1688, %v1767
    %v1776 = vadd.f32 %v1689, %v1769
    %v1777 = vxor.u32 %v1773, 2147483648
    %v1778 = vmul.f32 %v1777, 1.442695
    %v1779 = vpow.pop %v1778
    %v1780 = vadd.f32 %v1779, 1.0
    %v1781 = vrcp.pop %v1780
    %v1782 = vmul.f32 1.0, %v1781
    %v1783 = vxor.u32 %v1774, 2147483648
    %v1784 = vmul.f32 %v1783, 1.442695
    %v1785 = vpow.pop %v1784
    %v1786 = vadd.f32 %v1785, 1.0
    %v1787 = vrcp.pop %v1786
    %v1788 = vmul.f32 1.0, %v1787
    %v1789 = vtanh.pop %v1775
    %v1790 = vxor.u32 %v1776, 2147483648
    %v1791 = vmul.f32 %v1790, 1.442695
    %v1792 = vpow.pop %v1791
    %v1793 = vadd.f32 %v1792, 1.0
    %v1794 = vrcp.pop %v1793
    %v1795 = vmul.f32 1.0, %v1794
    %v1796 = vmul.f32 %v1788, %v1683
    %v1797 = vmul.f32 %v1782, %v1789
    %v1798 = vadd.f32 %v1796, %v1797
    %v1799 = vtanh.pop %v1798
    %v1800 = vmul.f32 %v1795, %v1799
    %v1801 = vld [vmem:[%s4] sm:$0xff]
    %v1802 = vld [vmem:[%s4 + $0x8] sm:$0xff]
    %v1803 = vld [vmem:[%s4 + $0x10] sm:$0xff]
    %v1804 = vld [vmem:[%s4 + $0x18] sm:$0xff]
    %v1805 = vld [vmem:[%s4 + $0x20] sm:$0xff]
    %v1806 = vld [vmem:[%s4 + $0x28] sm:$0xff]
    %v1807 = vld [vmem:[%s4 + $0x30] sm:$0xff]
    %v1808 = vld [vmem:[%s4 + $0x38] sm:$0xff]
    %v1809 = vld [vmem:[%s4 + $0x40] sm:$0xff]
    %v1810 = vld [vmem:[%s4 + $0x48] sm:$0xff]
    %v1811 = vld [vmem:[%s4 + $0x50] sm:$0xff]
    %v1812 = vld [vmem:[%s4 + $0x58] sm:$0xff]
    %v1813 = vld [vmem:[%s4 + $0x60] sm:$0xff]
    %v1814 = vld [vmem:[%s4 + $0x68] sm:$0xff]
    %v1815 = vld [vmem:[%s4 + $0x70] sm:$0xff]
    %v1816 = vld [vmem:[%s4 + $0x78] sm:$0xff]
    %v1817 = vld [vmem:[%s5] sm:$0x1]
    %v1819 = vlaneseq
    %v1820 = vshrl.u32 %v1819, 7
    %v1821 = vsub.s32 0, %v1820
    %v1822 = vrot.slane %v1817, %v1821
    %1824 = vmatprep.subr.mxu0 0.0
    %1825 = vmatpush1.msra.mxu0 %v1801
    %1826 = vmatprep.subr.mxu0 0.0
    %1827 = vmatpush1.msra.mxu0 %v1802
    %1828 = vmatprep.subr.mxu0 0.0
    %1829 = vmatpush1.msra.mxu0 %v1803
    %1830 = vmatprep.subr.mxu0 0.0
    %1831 = vmatpush1.msra.mxu0 %v1804
    %1832 = vmatprep.subr.mxu0 0.0
    %1833 = vmatpush1.msra.mxu0 %v1805
    %1834 = vmatprep.subr.mxu0 0.0
    %1835 = vmatpush1.msra.mxu0 %v1806
    %1836 = vmatprep.subr.mxu0 0.0
    %1837 = vmatpush1.msra.mxu0 %v1807
    %1838 = vmatprep.subr.mxu0 0.0
    %1839 = vmatpush1.msra.mxu0 %v1808
    %1840 = vmatprep.subr.mxu0 0.0
    %1841 = vmatpush1.msra.mxu0 %v1809
    %1842 = vmatprep.subr.mxu0 0.0
    %1843 = vmatpush1.msra.mxu0 %v1810
    %1844 = vmatprep.subr.mxu0 0.0
    %1845 = vmatpush1.msra.mxu0 %v1811
    %1846 = vmatprep.subr.mxu0 0.0
    %1847 = vmatpush1.msra.mxu0 %v1812
    %1848 = vmatprep.subr.mxu0 0.0
    %1849 = vmatpush1.msra.mxu0 %v1813
    %1850 = vmatprep.subr.mxu0 0.0
    %1851 = vmatpush1.msra.mxu0 %v1814
    %1852 = vmatprep.subr.mxu0 0.0
    %1853 = vmatpush1.msra.mxu0 %v1815
    %1854 = vmatprep.subr.mxu0 0.0
    %1855 = vmatpush1.msra.mxu0 %v1816
    %1856 = vmatprep.subr.mxu0 0.0
    %1857 = vmatpush1.msra.mxu0 0.0
    %1858 = vmatprep.subr.mxu0 0.0
    %1859 = vmatpush1.msra.mxu0 0.0
    %1860 = vmatprep.subr.mxu0 0.0
    %1861 = vmatpush1.msra.mxu0 0.0
    %1862 = vmatprep.subr.mxu0 0.0
    %1863 = vmatpush1.msra.mxu0 0.0
    %1864 = vmatprep.subr.mxu0 0.0
    %1865 = vmatpush1.msra.mxu0 0.0
    %1866 = vmatprep.subr.mxu0 0.0
    %1867 = vmatpush1.msra.mxu0 0.0
    %1868 = vmatprep.subr.mxu0 0.0
    %1869 = vmatpush1.msra.mxu0 0.0
    %1870 = vmatprep.subr.mxu0 0.0
    %1871 = vmatpush1.msra.mxu0 0.0
    %1872 = vmatprep.subr.mxu0 0.0
    %1873 = vmatpush1.msra.mxu0 0.0
    %1874 = vmatprep.subr.mxu0 0.0
    %1875 = vmatpush1.msra.mxu0 0.0
    %1876 = vmatprep.subr.mxu0 0.0
    %1877 = vmatpush1.msra.mxu0 0.0
    %1878 = vmatprep.subr.mxu0 0.0
    %1879 = vmatpush1.msra.mxu0 0.0
    %1880 = vmatprep.subr.mxu0 0.0
    %1881 = vmatpush1.msra.mxu0 0.0
    %1882 = vmatprep.subr.mxu0 0.0
    %1883 = vmatpush1.msra.mxu0 0.0
    %1884 = vmatprep.subr.mxu0 0.0
    %1885 = vmatpush1.msra.mxu0 0.0
    %1886 = vmatprep.subr.mxu0 0.0
    %1887 = vmatpush1.msra.mxu0 0.0
    %1888 = vmatprep.mubr.f32.mxu0 0.0
    %1889 = vmatmul.mubr.f32.gmra.mrb[0].mxu0 %v1800
    %v1890 = vpop.f32.mrb[0].mxu0
    %v1891 = vadd.f32 %v1822, %v1890
    %v1892 = vpop.f32.mrb[0].mxu0
    %1893 = vdwg.mxu0
    %v1894 = vtanh.pop %v1891
    %v1895 = vld [vmem:[#allocation5] sm:$0xff]
    %v1896 = vld [vmem:[#allocation5 + $0x8] sm:$0xff]
    %v1897 = vld [vmem:[#allocation5 + $0x10] sm:$0xff]
    %v1898 = vld [vmem:[#allocation5 + $0x18] sm:$0xff]
    %v1899 = vld [vmem:[#allocation5 + $0x20] sm:$0xff]
    %v1900 = vld [vmem:[#allocation5 + $0x28] sm:$0xff]
    %v1901 = vld [vmem:[#allocation5 + $0x30] sm:$0xff]
    %v1902 = vld [vmem:[#allocation5 + $0x38] sm:$0xff]
    %v1903 = vld [vmem:[#allocation5 + $0x40] sm:$0xff]
    %v1904 = vld [vmem:[#allocation5 + $0x48] sm:$0xff]
    %v1905 = vld [vmem:[#allocation5 + $0x50] sm:$0xff]
    %v1906 = vld [vmem:[#allocation5 + $0x58] sm:$0xff]
    %v1907 = vld [vmem:[#allocation5 + $0x60] sm:$0xff]
    %v1908 = vld [vmem:[#allocation5 + $0x68] sm:$0xff]
    %v1909 = vld [vmem:[#allocation5 + $0x70] sm:$0xff]
    %v1910 = vld [vmem:[#allocation5 + $0x78] sm:$0xff]
    %v1911 = vld [vmem:[%s7] sm:$0x1]
    %v1913 = vlaneseq
    %v1914 = vshrl.u32 %v1913, 7
    %v1915 = vsub.s32 0, %v1914
    %v1916 = vrot.slane %v1911, %v1915
    %1918 = vmatprep.subr.mxu0 0.0
    %1919 = vmatpush1.msra.mxu0 %v1895
    %1920 = vmatprep.subr.mxu0 0.0
    %1921 = vmatpush1.msra.mxu0 %v1896
    %1922 = vmatprep.subr.mxu0 0.0
    %1923 = vmatpush1.msra.mxu0 %v1897
    %1924 = vmatprep.subr.mxu0 0.0
    %1925 = vmatpush1.msra.mxu0 %v1898
    %1926 = vmatprep.subr.mxu0 0.0
    %1927 = vmatpush1.msra.mxu0 %v1899
    %1928 = vmatprep.subr.mxu0 0.0
    %1929 = vmatpush1.msra.mxu0 %v1900
    %1930 = vmatprep.subr.mxu0 0.0
    %1931 = vmatpush1.msra.mxu0 %v1901
    %1932 = vmatprep.subr.mxu0 0.0
    %1933 = vmatpush1.msra.mxu0 %v1902
    %1934 = vmatprep.subr.mxu0 0.0
    %1935 = vmatpush1.msra.mxu0 %v1903
    %1936 = vmatprep.subr.mxu0 0.0
    %1937 = vmatpush1.msra.mxu0 %v1904
    %1938 = vmatprep.subr.mxu0 0.0
    %1939 = vmatpush1.msra.mxu0 %v1905
    %1940 = vmatprep.subr.mxu0 0.0
    %1941 = vmatpush1.msra.mxu0 %v1906
    %1942 = vmatprep.subr.mxu0 0.0
    %1943 = vmatpush1.msra.mxu0 %v1907
    %1944 = vmatprep.subr.mxu0 0.0
    %1945 = vmatpush1.msra.mxu0 %v1908
    %1946 = vmatprep.subr.mxu0 0.0
    %1947 = vmatpush1.msra.mxu0 %v1909
    %1948 = vmatprep.subr.mxu0 0.0
    %1949 = vmatpush1.msra.mxu0 %v1910
    %1950 = vmatprep.subr.mxu0 0.0
    %1951 = vmatpush1.msra.mxu0 0.0
    %1952 = vmatprep.subr.mxu0 0.0
    %1953 = vmatpush1.msra.mxu0 0.0
    %1954 = vmatprep.subr.mxu0 0.0
    %1955 = vmatpush1.msra.mxu0 0.0
    %1956 = vmatprep.subr.mxu0 0.0
    %1957 = vmatpush1.msra.mxu0 0.0
    %1958 = vmatprep.subr.mxu0 0.0
    %1959 = vmatpush1.msra.mxu0 0.0
    %1960 = vmatprep.subr.mxu0 0.0
    %1961 = vmatpush1.msra.mxu0 0.0
    %1962 = vmatprep.subr.mxu0 0.0
    %1963 = vmatpush1.msra.mxu0 0.0
    %1964 = vmatprep.subr.mxu0 0.0
    %1965 = vmatpush1.msra.mxu0 0.0
    %1966 = vmatprep.subr.mxu0 0.0
    %1967 = vmatpush1.msra.mxu0 0.0
    %1968 = vmatprep.subr.mxu0 0.0
    %1969 = vmatpush1.msra.mxu0 0.0
    %1970 = vmatprep.subr.mxu0 0.0
    %1971 = vmatpush1.msra.mxu0 0.0
    %1972 = vmatprep.subr.mxu0 0.0
    %1973 = vmatpush1.msra.mxu0 0.0
    %1974 = vmatprep.subr.mxu0 0.0
    %1975 = vmatpush1.msra.mxu0 0.0
    %1976 = vmatprep.subr.mxu0 0.0
    %1977 = vmatpush1.msra.mxu0 0.0
    %1978 = vmatprep.subr.mxu0 0.0
    %1979 = vmatpush1.msra.mxu0 0.0
    %1980 = vmatprep.subr.mxu0 0.0
    %1981 = vmatpush1.msra.mxu0 0.0
    %1982 = vmatprep.mubr.f32.mxu0 0.0
    %1983 = vmatmul.mubr.f32.gmra.mrb[0].mxu0 %v1894
    %v1984 = vpop.f32.mrb[0].mxu0
    %v1985 = vadd.f32 %v1916, %v1984
    %v1986 = vpop.f32.mrb[0].mxu0
    %1987 = vdwg.mxu0
    %v1988 = vtanh.pop %v1985
    %1989 = vst [vmem:[%s8] sm:$0xff] %v1988
    // Predicated region
    $region42: #{rnn_model_forward.1} parent=1 // pred_check
      _
    $region43: #{rnn_model_forward.1} parent=1 // pred_check_branch
      %1991 = sbr.rel (0) target = $region45
    $region44: #{rnn_model_forward.1} parent=1 // pred_region
      _
    $region45: #{rnn_model_forward.1} parent=1 // pred_fallthru
      _
    // Predicated region
    $region46: #{rnn_model_forward.1} parent=1 // pred_check
      _
    $region47: #{rnn_model_forward.1} parent=1 // pred_check_branch
      %1993 = sbr.rel (0) target = $region49
    $region48: #{rnn_model_forward.1} parent=1 // pred_region
      _
    $region49: #{rnn_model_forward.1} parent=1 // pred_fallthru
      _
    %1994 = vsyncpa [#allocation4], 1
    %1995 = vsyncpa [#allocation6], 1

</llo_original>
